<compile_context>
chip_gen: v6e
topology: v6e:2x2x1
jax: 0.10.0
libtpu: 0.0.40
codegen_flags: <defaults>
</compile_context>

<pallas_src>
import functools
import math

import jax
import jax.numpy as jnp
from jax import lax
from jax.experimental import pallas as pl
from jax.experimental.pallas import tpu as pltpu

EPS = 1e-5  # nn.BatchNorm2d default eps


# -----------------------------------------------------------------------------
# banded conv weights: (3,3,Cin,Cout) HWIO -> (3, W*Cin, W*Cout) block-banded
# -----------------------------------------------------------------------------
def _banded_weight(w_hwio, width):
    """Fold the kx-tap and input-channel contraction into one matmul K dimension.

    K column-block s is spatial column s (lane-dense (W*C) layout).  The SAME
    padding columns -1 / W are simply absent: their contribution is zero, so
    K = W*Cin (no halo columns).
    """
    kh, kw, cin, cout = w_hwio.shape
    K = width * cin
    Q = width * cout
    s = jnp.arange(K) // cin
    ci = jnp.arange(K) % cin
    wq = jnp.arange(Q) // cout
    co = jnp.arange(Q) % cout
    dx = s[:, None] - wq[None, :] + 1                  # kernel x tap
    valid = (dx >= 0) & (dx < kw)
    dxc = jnp.clip(dx, 0, kw - 1)
    big = w_hwio[:, dxc, ci[:, None], co[None, :]]     # (3, K, Q)
    return jnp.where(valid[None], big, jnp.zeros_like(big))


# -----------------------------------------------------------------------------
# in-kernel helpers
# -----------------------------------------------------------------------------
def _store_padded(xpad_ref, xval, *, Nb, H):
    """Write Nb images (each (H, W*C), f32 value) into the stacked
    (Nb*(H+2), W*C) bf16 scratch.  Only the 1-row top/bottom halos per image
    are zeroed; x/h are cast to bf16 exactly once here."""
    WC = xval.shape[-1]
    zrow = jnp.zeros((1, WC), xpad_ref.dtype)
    xb = xval.astype(xpad_ref.dtype)
    for i in range(Nb):
        base = i * (H + 2)
        xpad_ref[base:base + 1, :] = zrow
        xpad_ref[base + H + 1:base + H + 2, :] = zrow
        xpad_ref[base + 1:base + H + 1, :] = xb[i]


def _conv3x3_banded(xpad_ref, wbig_ref, *, M):
    """3x3 'SAME' conv of the stacked images as 3 fused-K (K = W*C) MXU matmuls.
    bf16 operands, f32 accumulation.  Output row m corresponds to stacked row m;
    the 2 rows between consecutive images are junk and are never read."""
    acc = None
    for ky in range(3):
        rows = xpad_ref[ky:ky + M, :]                  # (M, W*C) bf16, no re-cast
        term = jnp.dot(rows, wbig_ref[ky], preferred_element_type=jnp.float32)
        acc = term if acc is None else acc + term
    return acc                                          # (M, W*C) f32


# -----------------------------------------------------------------------------
# kernels
# -----------------------------------------------------------------------------
def _conv1_stats_kernel(x_ref, w1_ref, stats_ref, xpad_ref, *, Nb, H):
    M = Nb * (H + 2) - 2
    _store_padded(xpad_ref, x_ref[...], Nb=Nb, H=H)
    acc = _conv3x3_banded(xpad_ref, w1_ref, M=M)        # bias-free conv1
    WC = acc.shape[-1]
    s1 = jnp.zeros((1, WC), jnp.float32)
    s2 = jnp.zeros((1, WC), jnp.float32)
    for i in range(Nb):                                 # sum only valid rows
        base = i * (H + 2)
        a = acc[base:base + H]
        s1 = s1 + jnp.sum(a, axis=0, keepdims=True)
        s2 = s2 + jnp.sum(a * a, axis=0, keepdims=True)
    stats_ref[0] = jnp.concatenate([s1, s2], axis=0)    # (2, W*C)


def _block_kernel(x_ref, w1_ref, scale_ref, shift_ref, w2_ref, b2_ref,
                  o_ref, xpad_ref, *, Nb, H):
    M = Nb * (H + 2) - 2
    xin = x_ref[...]                                    # (Nb, H, W*C) f32
    _store_padded(xpad_ref, xin, Nb=Nb, H=H)
    acc = _conv3x3_banded(xpad_ref, w1_ref, M=M)
    # BN affine (conv1 bias already folded into shift) + ReLU, f32 on the VPU.
    h = jnp.maximum(acc * scale_ref[...] + shift_ref[...], 0.0)
    hb = h.astype(xpad_ref.dtype)                       # single f32->bf16 cast
    for i in range(Nb):
        base = i * (H + 2)
        xpad_ref[base + 1:base + H + 1, :] = hb[base:base + H]   # halos stay 0
    acc2 = _conv3x3_banded(xpad_ref, w2_ref, M=M)
    b2 = b2_ref[...]                                    # (1, W*C) f32
    for i in range(Nb):
        base = i * (H + 2)
        o_ref[i] = jnp.maximum(acc2[base:base + H] + b2 + xin[i], 0.0)


# -----------------------------------------------------------------------------
# wrapper: NHWC in / NHWC out (channels-last, lane-dense, no boundary transpose)
# -----------------------------------------------------------------------------
def _pick_batch_chunk(N, H, m_target=128):
    """Largest Nb | N such that the stacked scratch has <= m_target rows and the
    grid keeps >= 2 steps whenever N >= 2 (v7x has 2 TensorCores)."""
    best = 1
    for nb in range(1, N + 1):
        if N % nb:
            continue
        if N >= 2 and N // nb < 2:
            continue
        if nb * (H + 2) > m_target:
            continue
        best = nb
    return best


@jax.jit
def residual_block_nhwc(x_nhwc, params):
    w1, b1, gamma, beta, w2, b2 = params
    del b1  # a conv bias feeding a train-mode BatchNorm cancels exactly (folded below)
    N, H, W, C = x_nhwc.shape
    WC = W * C
    # NOTE: for non-demo shapes keep W*C a multiple of 128 (pad W or C) so the
    # output store stays lane-dense; the demo uses W*C = 128.

    x = x_nhwc.reshape(N, H, WC).astype(jnp.float32)    # free view of NHWC

    # MXU operands in bf16 (f32 accumulation); bias / BN params stay f32.
    w1b = _banded_weight(w1.astype(jnp.float32), W).astype(jnp.bfloat16)
    w2b = _banded_weight(w2.astype(jnp.float32), W).astype(jnp.bfloat16)
    b2b = jnp.tile(b2.astype(jnp.float32), W).reshape(1, WC)

    Nb = _pick_batch_chunk(N, H)
    steps = N // Nb

    cparams = pltpu.CompilerParams(
        dimension_semantics=("parallel",),       # shard batch chunks across v7x's 2 TCs
        vmem_limit_bytes=32 * 1024 * 1024,       # explicit; actual footprint ~1 MB
    )
    act_spec = pl.BlockSpec((Nb, H, WC), lambda n: (n, 0, 0))
    wgt_spec = pl.BlockSpec((3, WC, WC), lambda n: (0, 0, 0))   # resident weights
    vec_spec = pl.BlockSpec((1, WC), lambda n: (0, 0))          # resident vectors
    scratch = [pltpu.VMEM((Nb * (H + 2), WC), jnp.bfloat16)]

    # ---- pass 1: bias-free conv1 + per-chunk (sum, sum-sq) BN partials -------
    stats = pl.pallas_call(
        functools.partial(_conv1_stats_kernel, Nb=Nb, H=H),
        out_shape=jax.ShapeDtypeStruct((steps, 2, WC), jnp.float32),
        grid=(steps,),
        in_specs=[act_spec, wgt_spec],
        out_specs=pl.BlockSpec((1, 2, WC), lambda n: (n, 0, 0)),
        scratch_shapes=scratch,
        compiler_params=cparams,
    )(x, w1b)

    # ---- tiny JAX glue: batch stats -> BN scale/shift (train-mode BN) --------
    s = stats.sum(axis=0).reshape(2, W, C).sum(axis=1)          # (2, C)
    cnt = jnp.float32(N * H * W)
    mean = s[0] / cnt                                           # mean of bias-free conv1
    var = jnp.maximum(s[1] / cnt - mean * mean, 0.0)            # biased, one-pass, f32
    scale = gamma.astype(jnp.float32) * lax.rsqrt(var + EPS)
    shift = beta.astype(jnp.float32) - mean * scale             # == folded conv1-bias form
    scale_b = jnp.tile(scale, W).reshape(1, WC)
    shift_b = jnp.tile(shift, W).reshape(1, WC)
    # TODO(synk): BatchNorm2d running_mean/running_var buffer updates (training-time
    # side effect) are not modeled; only the functional forward pass is computed.

    # ---- pass 2: conv1 -> BN -> ReLU -> conv2 -> +x -> ReLU -------------------
    out = pl.pallas_call(
        functools.partial(_block_kernel, Nb=Nb, H=H),
        out_shape=jax.ShapeDtypeStruct((N, H, WC), jnp.float32),
        grid=(steps,),
        in_specs=[act_spec, wgt_spec, vec_spec, vec_spec, wgt_spec, vec_spec],
        out_specs=act_spec,                                     # lane-dense output
        scratch_shapes=scratch,
        compiler_params=cparams,
    )(x, w1b, scale_b, shift_b, w2b, b2b)

    return out.reshape(N, H, W, C)                              # free view -> NHWC


def residual_block_nchw(x_nchw, params):
    """Drop-in for the PyTorch NCHW interface.  Pays two HBM transposes; prefer
    residual_block_nhwc inside a channels-last pipeline."""
    y = residual_block_nhwc(jnp.transpose(x_nchw, (0, 2, 3, 1)), params)
    return jnp.transpose(y, (0, 3, 1, 2))


# -----------------------------------------------------------------------------
# params + pure-JAX reference (NHWC)
# -----------------------------------------------------------------------------
def init_params(key, channels):
    """Deterministic init mimicking nn.Conv2d defaults (uniform +/- 1/sqrt(fan_in))."""
    k1, k2, k3, k4 = jax.random.split(key, 4)
    bound = 1.0 / math.sqrt(channels * 9)
    w1 = jax.random.uniform(k1, (3, 3, channels, channels), jnp.float32, -bound, bound)
    b1 = jax.random.uniform(k2, (channels,), jnp.float32, -bound, bound)
    w2 = jax.random.uniform(k3, (3, 3, channels, channels), jnp.float32, -bound, bound)
    b2 = jax.random.uniform(k4, (channels,), jnp.float32, -bound, bound)
    gamma = jnp.ones((channels,), jnp.float32)   # BN weight init
    beta = jnp.zeros((channels,), jnp.float32)   # BN bias init
    return w1, b1, gamma, beta, w2, b2


def residual_block_reference_nhwc(x_nhwc, params, matmul_dtype=jnp.float32):
    """Pure-JAX reference.  matmul_dtype=bfloat16 mirrors the kernel's MXU operand
    precision (accumulation is f32 in both)."""
    w1, b1, gamma, beta, w2, b2 = params
    x = x_nhwc.astype(jnp.float32)

    def conv(inp, w, b):
        y = lax.conv_general_dilated(
            inp.astype(matmul_dtype), w.astype(matmul_dtype),
            window_strides=(1, 1), padding="SAME",
            dimension_numbers=("NHWC", "HWIO", "NHWC"),
            preferred_element_type=jnp.float32)
        return y + b.reshape(1, 1, 1, -1).astype(jnp.float32)

    h = conv(x, w1, b1)
    mean = jnp.mean(h, axis=(0, 1, 2), keepdims=True)
    var = jnp.mean((h - mean) ** 2, axis=(0, 1, 2), keepdims=True)
    h = (h - mean) * lax.rsqrt(var + EPS) * gamma.reshape(1, 1, 1, -1) \
        + beta.reshape(1, 1, 1, -1)
    h = jnp.maximum(h, 0.0)
    h = conv(h, w2, b2)
    return jnp.maximum(h + x, 0.0)


if __name__ == "__main__":
    key = jax.random.PRNGKey(0)
    kx1, kx2, kp = jax.random.split(key, 3)

    C, H, W = 8, 16, 16                       # W*C = 128 -> fully lane-dense layout
    params = init_params(kp, C)

    def check(x_nhwc):
        out = jax.block_until_ready(residual_block_nhwc(x_nhwc, params))
        assert out.shape == x_nhwc.shape
        # numerics-matched reference (bf16 MXU operands, f32 accumulation): tight check
        ref_b = residual_block_reference_nhwc(x_nhwc, params, matmul_dtype=jnp.bfloat16)
        err_b = float(jnp.max(jnp.abs(out - ref_b)))
        assert jnp.allclose(out, ref_b, atol=2e-3, rtol=2e-3), \
            f"bf16-matched max abs diff = {err_b}"
        # full-f32 module semantics: looser tolerance covers only bf16 operand rounding
        ref_f = residual_block_reference_nhwc(x_nhwc, params, matmul_dtype=jnp.float32)
        err_f = float(jnp.max(jnp.abs(out - ref_f)))
        assert jnp.allclose(out, ref_f, atol=5e-2, rtol=5e-2), \
            f"f32 max abs diff = {err_f}"

    # demo shape: Nb = 1, grid = 2 -> both v7x TensorCores get a step
    check(jax.random.normal(kx1, (2, H, W, C), jnp.float32))
    # larger batch exercising image stacking: Nb = 4, M = 70 rows per MXU matmul
    check(jax.random.normal(kx2, (8, H, W, C), jnp.float32))

    print("KERNEL_OK")
</pallas_src>

<mosaic_0001>
module attributes {stable_mosaic.version = 11 : i64} {
  func.func @_conv1_stats_kernel(%arg0: i32, %arg1: memref<1x16x128xf32, #tpu.memory_space<vmem>>, %arg2: memref<3x128x128xbf16, #tpu.memory_space<vmem>>, %arg3: memref<1x2x128xf32, #tpu.memory_space<vmem>>, %arg4: memref<18x128xbf16, #tpu.memory_space<vmem>>) attributes {dimension_semantics = [#tpu.dimension_semantics<parallel>], iteration_bounds = array<i64: 2>, scalar_prefetch = 0 : i64, scratch_operands = 1 : i64, tpu.core_type = #tpu.core_type<tc>, window_params = [{transform_indices = @transform_0, window_bounds = array<i64: 1, 16, 128>}, {pipeline_mode = #tpu.pipeline_mode<synchronous>, transform_indices = @transform_1, window_bounds = array<i64: 3, 128, 128>}, {transform_indices = @transform_2, window_bounds = array<i64: 1, 2, 128>}]} {
    %c0 = arith.constant 0 : index
    %c0_0 = arith.constant 0 : index
    %c0_1 = arith.constant 0 : index
    %0 = vector.load %arg1[%c0, %c0_0, %c0_1] : memref<1x16x128xf32, #tpu.memory_space<vmem>>, vector<1x16x128xf32>
    %cst = arith.constant 0.000000e+00 : bf16
    %1 = vector.broadcast %cst : bf16 to vector<1x128xbf16>
    %2 = arith.truncf %0 : vector<1x16x128xf32> to vector<1x16x128xbf16>
    %c0_2 = arith.constant 0 : index
    %c0_3 = arith.constant 0 : index
    %3 = vector.load %arg4[%c0_2, %c0_3] : memref<18x128xbf16, #tpu.memory_space<vmem>>, vector<1x128xbf16>
    tpu.vector_store %arg4[%c0_2, %c0_3], %1 {strides = array<i32>} : memref<18x128xbf16, #tpu.memory_space<vmem>>, vector<1x128xbf16>,
    %c17 = arith.constant 17 : index
    %c0_4 = arith.constant 0 : index
    %4 = vector.load %arg4[%c17, %c0_4] : memref<18x128xbf16, #tpu.memory_space<vmem>>, vector<1x128xbf16>
    tpu.vector_store %arg4[%c17, %c0_4], %1 {strides = array<i32>} : memref<18x128xbf16, #tpu.memory_space<vmem>>, vector<1x128xbf16>,
    %5 = vector.shape_cast %2 : vector<1x16x128xbf16> to vector<16x128xbf16>
    %c1 = arith.constant 1 : index
    %c0_5 = arith.constant 0 : index
    %6 = vector.load %arg4[%c1, %c0_5] : memref<18x128xbf16, #tpu.memory_space<vmem>>, vector<16x128xbf16>
    tpu.vector_store %arg4[%c1, %c0_5], %5 {strides = array<i32>} : memref<18x128xbf16, #tpu.memory_space<vmem>>, vector<16x128xbf16>,
    %c0_6 = arith.constant 0 : index
    %c0_7 = arith.constant 0 : index
    %7 = vector.load %arg4[%c0_6, %c0_7] : memref<18x128xbf16, #tpu.memory_space<vmem>>, vector<16x128xbf16>
    %c0_8 = arith.constant 0 : index
    %c0_9 = arith.constant 0 : index
    %c0_10 = arith.constant 0 : index
    %8 = vector.load %arg2[%c0_8, %c0_9, %c0_10] : memref<3x128x128xbf16, #tpu.memory_space<vmem>>, vector<1x128x128xbf16>
    %9 = vector.shape_cast %8 : vector<1x128x128xbf16> to vector<128x128xbf16>
    %cst_11 = arith.constant dense<0.000000e+00> : vector<16x128xf32>
    %10 = tpu.matmul %7, %9, %cst_11 {dimension_numbers = #tpu.dot_dimension_numbers<[1], [0], [0], [1], [0, 0, 1, 1], [], []>} : vector<16x128xbf16>, vector<128x128xbf16>, vector<16x128xf32> -> vector<16x128xf32>
    %c1_12 = arith.constant 1 : index
    %c0_13 = arith.constant 0 : index
    %11 = vector.load %arg4[%c1_12, %c0_13] : memref<18x128xbf16, #tpu.memory_space<vmem>>, vector<16x128xbf16>
    %c1_14 = arith.constant 1 : index
    %c0_15 = arith.constant 0 : index
    %c0_16 = arith.constant 0 : index
    %12 = vector.load %arg2[%c1_14, %c0_15, %c0_16] : memref<3x128x128xbf16, #tpu.memory_space<vmem>>, vector<1x128x128xbf16>
    %13 = vector.shape_cast %12 : vector<1x128x128xbf16> to vector<128x128xbf16>
    %cst_17 = arith.constant dense<0.000000e+00> : vector<16x128xf32>
    %14 = tpu.matmul %11, %13, %cst_17 {dimension_numbers = #tpu.dot_dimension_numbers<[1], [0], [0], [1], [0, 0, 1, 1], [], []>} : vector<16x128xbf16>, vector<128x128xbf16>, vector<16x128xf32> -> vector<16x128xf32>
    %15 = arith.addf %10, %14 : vector<16x128xf32>
    %c2 = arith.constant 2 : index
    %c0_18 = arith.constant 0 : index
    %16 = vector.load %arg4[%c2, %c0_18] : memref<18x128xbf16, #tpu.memory_space<vmem>>, vector<16x128xbf16>
    %c2_19 = arith.constant 2 : index
    %c0_20 = arith.constant 0 : index
    %c0_21 = arith.constant 0 : index
    %17 = vector.load %arg2[%c2_19, %c0_20, %c0_21] : memref<3x128x128xbf16, #tpu.memory_space<vmem>>, vector<1x128x128xbf16>
    %18 = vector.shape_cast %17 : vector<1x128x128xbf16> to vector<128x128xbf16>
    %cst_22 = arith.constant dense<0.000000e+00> : vector<16x128xf32>
    %19 = tpu.matmul %16, %18, %cst_22 {dimension_numbers = #tpu.dot_dimension_numbers<[1], [0], [0], [1], [0, 0, 1, 1], [], []>} : vector<16x128xbf16>, vector<128x128xbf16>, vector<16x128xf32> -> vector<16x128xf32>
    %20 = arith.addf %15, %19 : vector<16x128xf32>
    %cst_23 = arith.constant 0.000000e+00 : f32
    %21 = vector.broadcast %cst_23 : f32 to vector<1x128xf32>
    %cst_24 = arith.constant 0.000000e+00 : f32
    %22 = vector.broadcast %cst_24 : f32 to vector<1x128xf32>
    %cst_25 = arith.constant dense<0.000000e+00> : vector<128xf32>
    %23 = vector.multi_reduction <add>, %20, %cst_25 [0] : vector<16x128xf32> to vector<128xf32>
    %24 = vector.shape_cast %23 : vector<128xf32> to vector<1x128xf32>
    %25 = arith.addf %21, %24 : vector<1x128xf32>
    %26 = arith.mulf %20, %20 : vector<16x128xf32>
    %cst_26 = arith.constant dense<0.000000e+00> : vector<128xf32>
    %27 = vector.multi_reduction <add>, %26, %cst_26 [0] : vector<16x128xf32> to vector<128xf32>
    %28 = vector.shape_cast %27 : vector<128xf32> to vector<1x128xf32>
    %29 = arith.addf %22, %28 : vector<1x128xf32>
    %30 = tpu.concatenate %25, %29 in 0 : vector<1x128xf32>, vector<1x128xf32> -> vector<2x128xf32>
    %c0_27 = arith.constant 0 : index
    %c0_28 = arith.constant 0 : index
    %c0_29 = arith.constant 0 : index
    %31 = vector.load %arg3[%c0_27, %c0_28, %c0_29] : memref<1x2x128xf32, #tpu.memory_space<vmem>>, vector<1x2x128xf32>
    %32 = vector.shape_cast %31 : vector<1x2x128xf32> to vector<2x128xf32>
    %33 = vector.shape_cast %30 : vector<2x128xf32> to vector<1x2x128xf32>
    tpu.vector_store %arg3[%c0_27, %c0_28, %c0_29], %33 {strides = array<i32>} : memref<1x2x128xf32, #tpu.memory_space<vmem>>, vector<1x2x128xf32>,
    return
  }
  func.func @transform_0(%arg0: i32) -> (i32, i32, i32) {
    %c0_i32 = arith.constant 0 : i32
    %c0_i32_0 = arith.constant 0 : i32
    %c0_i32_1 = arith.constant 0 : i32
    return %arg0, %c0_i32, %c0_i32_0 : i32, i32, i32
  }
  func.func @transform_1(%arg0: i32) -> (i32, i32, i32) {
    %c0_i32 = arith.constant 0 : i32
    %c0_i32_0 = arith.constant 0 : i32
    %c0_i32_1 = arith.constant 0 : i32
    %c0_i32_2 = arith.constant 0 : i32
    return %c0_i32, %c0_i32_0, %c0_i32_1 : i32, i32, i32
  }
  func.func @transform_2(%arg0: i32) -> (i32, i32, i32) {
    %c0_i32 = arith.constant 0 : i32
    %c0_i32_0 = arith.constant 0 : i32
    %c0_i32_1 = arith.constant 0 : i32
    return %arg0, %c0_i32, %c0_i32_0 : i32, i32, i32
  }
}

module attributes {stable_mosaic.version = 11 : i64} {
  func.func @_block_kernel(%arg0: i32, %arg1: memref<1x16x128xf32, #tpu.memory_space<vmem>>, %arg2: memref<3x128x128xbf16, #tpu.memory_space<vmem>>, %arg3: memref<1x128xf32, #tpu.memory_space<vmem>>, %arg4: memref<1x128xf32, #tpu.memory_space<vmem>>, %arg5: memref<3x128x128xbf16, #tpu.memory_space<vmem>>, %arg6: memref<1x128xf32, #tpu.memory_space<vmem>>, %arg7: memref<1x16x128xf32, #tpu.memory_space<vmem>>, %arg8: memref<18x128xbf16, #tpu.memory_space<vmem>>) attributes {dimension_semantics = [#tpu.dimension_semantics<parallel>], iteration_bounds = array<i64: 2>, scalar_prefetch = 0 : i64, scratch_operands = 1 : i64, tpu.core_type = #tpu.core_type<tc>, window_params = [{transform_indices = @transform_0, window_bounds = array<i64: 1, 16, 128>}, {pipeline_mode = #tpu.pipeline_mode<synchronous>, transform_indices = @transform_1, window_bounds = array<i64: 3, 128, 128>}, {pipeline_mode = #tpu.pipeline_mode<synchronous>, transform_indices = @transform_2, window_bounds = array<i64: 1, 128>}, {pipeline_mode = #tpu.pipeline_mode<synchronous>, transform_indices = @transform_3, window_bounds = array<i64: 1, 128>}, {pipeline_mode = #tpu.pipeline_mode<synchronous>, transform_indices = @transform_4, window_bounds = array<i64: 3, 128, 128>}, {pipeline_mode = #tpu.pipeline_mode<synchronous>, transform_indices = @transform_5, window_bounds = array<i64: 1, 128>}, {transform_indices = @transform_6, window_bounds = array<i64: 1, 16, 128>}]} {
    %c0 = arith.constant 0 : index
    %c0_0 = arith.constant 0 : index
    %c0_1 = arith.constant 0 : index
    %0 = vector.load %arg1[%c0, %c0_0, %c0_1] : memref<1x16x128xf32, #tpu.memory_space<vmem>>, vector<1x16x128xf32>
    %cst = arith.constant 0.000000e+00 : bf16
    %1 = vector.broadcast %cst : bf16 to vector<1x128xbf16>
    %2 = arith.truncf %0 : vector<1x16x128xf32> to vector<1x16x128xbf16>
    %c0_2 = arith.constant 0 : index
    %c0_3 = arith.constant 0 : index
    %3 = vector.load %arg8[%c0_2, %c0_3] : memref<18x128xbf16, #tpu.memory_space<vmem>>, vector<1x128xbf16>
    tpu.vector_store %arg8[%c0_2, %c0_3], %1 {strides = array<i32>} : memref<18x128xbf16, #tpu.memory_space<vmem>>, vector<1x128xbf16>,
    %c17 = arith.constant 17 : index
    %c0_4 = arith.constant 0 : index
    %4 = vector.load %arg8[%c17, %c0_4] : memref<18x128xbf16, #tpu.memory_space<vmem>>, vector<1x128xbf16>
    tpu.vector_store %arg8[%c17, %c0_4], %1 {strides = array<i32>} : memref<18x128xbf16, #tpu.memory_space<vmem>>, vector<1x128xbf16>,
    %5 = vector.shape_cast %2 : vector<1x16x128xbf16> to vector<16x128xbf16>
    %c1 = arith.constant 1 : index
    %c0_5 = arith.constant 0 : index
    %6 = vector.load %arg8[%c1, %c0_5] : memref<18x128xbf16, #tpu.memory_space<vmem>>, vector<16x128xbf16>
    tpu.vector_store %arg8[%c1, %c0_5], %5 {strides = array<i32>} : memref<18x128xbf16, #tpu.memory_space<vmem>>, vector<16x128xbf16>,
    %c0_6 = arith.constant 0 : index
    %c0_7 = arith.constant 0 : index
    %7 = vector.load %arg8[%c0_6, %c0_7] : memref<18x128xbf16, #tpu.memory_space<vmem>>, vector<16x128xbf16>
    %c0_8 = arith.constant 0 : index
    %c0_9 = arith.constant 0 : index
    %c0_10 = arith.constant 0 : index
    %8 = vector.load %arg2[%c0_8, %c0_9, %c0_10] : memref<3x128x128xbf16, #tpu.memory_space<vmem>>, vector<1x128x128xbf16>
    %9 = vector.shape_cast %8 : vector<1x128x128xbf16> to vector<128x128xbf16>
    %cst_11 = arith.constant dense<0.000000e+00> : vector<16x128xf32>
    %10 = tpu.matmul %7, %9, %cst_11 {dimension_numbers = #tpu.dot_dimension_numbers<[1], [0], [0], [1], [0, 0, 1, 1], [], []>} : vector<16x128xbf16>, vector<128x128xbf16>, vector<16x128xf32> -> vector<16x128xf32>
    %c1_12 = arith.constant 1 : index
    %c0_13 = arith.constant 0 : index
    %11 = vector.load %arg8[%c1_12, %c0_13] : memref<18x128xbf16, #tpu.memory_space<vmem>>, vector<16x128xbf16>
    %c1_14 = arith.constant 1 : index
    %c0_15 = arith.constant 0 : index
    %c0_16 = arith.constant 0 : index
    %12 = vector.load %arg2[%c1_14, %c0_15, %c0_16] : memref<3x128x128xbf16, #tpu.memory_space<vmem>>, vector<1x128x128xbf16>
    %13 = vector.shape_cast %12 : vector<1x128x128xbf16> to vector<128x128xbf16>
    %cst_17 = arith.constant dense<0.000000e+00> : vector<16x128xf32>
    %14 = tpu.matmul %11, %13, %cst_17 {dimension_numbers = #tpu.dot_dimension_numbers<[1], [0], [0], [1], [0, 0, 1, 1], [], []>} : vector<16x128xbf16>, vector<128x128xbf16>, vector<16x128xf32> -> vector<16x128xf32>
    %15 = arith.addf %10, %14 : vector<16x128xf32>
    %c2 = arith.constant 2 : index
    %c0_18 = arith.constant 0 : index
    %16 = vector.load %arg8[%c2, %c0_18] : memref<18x128xbf16, #tpu.memory_space<vmem>>, vector<16x128xbf16>
    %c2_19 = arith.constant 2 : index
    %c0_20 = arith.constant 0 : index
    %c0_21 = arith.constant 0 : index
    %17 = vector.load %arg2[%c2_19, %c0_20, %c0_21] : memref<3x128x128xbf16, #tpu.memory_space<vmem>>, vector<1x128x128xbf16>
    %18 = vector.shape_cast %17 : vector<1x128x128xbf16> to vector<128x128xbf16>
    %cst_22 = arith.constant dense<0.000000e+00> : vector<16x128xf32>
    %19 = tpu.matmul %16, %18, %cst_22 {dimension_numbers = #tpu.dot_dimension_numbers<[1], [0], [0], [1], [0, 0, 1, 1], [], []>} : vector<16x128xbf16>, vector<128x128xbf16>, vector<16x128xf32> -> vector<16x128xf32>
    %20 = arith.addf %15, %19 : vector<16x128xf32>
    %c0_23 = arith.constant 0 : index
    %c0_24 = arith.constant 0 : index
    %21 = vector.load %arg3[%c0_23, %c0_24] : memref<1x128xf32, #tpu.memory_space<vmem>>, vector<1x128xf32>
    %22 = vector.broadcast %21 : vector<1x128xf32> to vector<16x128xf32>
    %23 = arith.mulf %20, %22 : vector<16x128xf32>
    %c0_25 = arith.constant 0 : index
    %c0_26 = arith.constant 0 : index
    %24 = vector.load %arg4[%c0_25, %c0_26] : memref<1x128xf32, #tpu.memory_space<vmem>>, vector<1x128xf32>
    %25 = vector.broadcast %24 : vector<1x128xf32> to vector<16x128xf32>
    %26 = arith.addf %23, %25 : vector<16x128xf32>
    %cst_27 = arith.constant 0.000000e+00 : f32
    %27 = vector.broadcast %cst_27 : f32 to vector<16x128xf32>
    %28 = arith.maximumf %26, %27 : vector<16x128xf32>
    %29 = arith.truncf %28 : vector<16x128xf32> to vector<16x128xbf16>
    %c1_28 = arith.constant 1 : index
    %c0_29 = arith.constant 0 : index
    %30 = vector.load %arg8[%c1_28, %c0_29] : memref<18x128xbf16, #tpu.memory_space<vmem>>, vector<16x128xbf16>
    tpu.vector_store %arg8[%c1_28, %c0_29], %29 {strides = array<i32>} : memref<18x128xbf16, #tpu.memory_space<vmem>>, vector<16x128xbf16>,
    %c0_30 = arith.constant 0 : index
    %c0_31 = arith.constant 0 : index
    %31 = vector.load %arg8[%c0_30, %c0_31] : memref<18x128xbf16, #tpu.memory_space<vmem>>, vector<16x128xbf16>
    %c0_32 = arith.constant 0 : index
    %c0_33 = arith.constant 0 : index
    %c0_34 = arith.constant 0 : index
    %32 = vector.load %arg5[%c0_32, %c0_33, %c0_34] : memref<3x128x128xbf16, #tpu.memory_space<vmem>>, vector<1x128x128xbf16>
    %33 = vector.shape_cast %32 : vector<1x128x128xbf16> to vector<128x128xbf16>
    %cst_35 = arith.constant dense<0.000000e+00> : vector<16x128xf32>
    %34 = tpu.matmul %31, %33, %cst_35 {dimension_numbers = #tpu.dot_dimension_numbers<[1], [0], [0], [1], [0, 0, 1, 1], [], []>} : vector<16x128xbf16>, vector<128x128xbf16>, vector<16x128xf32> -> vector<16x128xf32>
    %c1_36 = arith.constant 1 : index
    %c0_37 = arith.constant 0 : index
    %35 = vector.load %arg8[%c1_36, %c0_37] : memref<18x128xbf16, #tpu.memory_space<vmem>>, vector<16x128xbf16>
    %c1_38 = arith.constant 1 : index
    %c0_39 = arith.constant 0 : index
    %c0_40 = arith.constant 0 : index
    %36 = vector.load %arg5[%c1_38, %c0_39, %c0_40] : memref<3x128x128xbf16, #tpu.memory_space<vmem>>, vector<1x128x128xbf16>
    %37 = vector.shape_cast %36 : vector<1x128x128xbf16> to vector<128x128xbf16>
    %cst_41 = arith.constant dense<0.000000e+00> : vector<16x128xf32>
    %38 = tpu.matmul %35, %37, %cst_41 {dimension_numbers = #tpu.dot_dimension_numbers<[1], [0], [0], [1], [0, 0, 1, 1], [], []>} : vector<16x128xbf16>, vector<128x128xbf16>, vector<16x128xf32> -> vector<16x128xf32>
    %39 = arith.addf %34, %38 : vector<16x128xf32>
    %c2_42 = arith.constant 2 : index
    %c0_43 = arith.constant 0 : index
    %40 = vector.load %arg8[%c2_42, %c0_43] : memref<18x128xbf16, #tpu.memory_space<vmem>>, vector<16x128xbf16>
    %c2_44 = arith.constant 2 : index
    %c0_45 = arith.constant 0 : index
    %c0_46 = arith.constant 0 : index
    %41 = vector.load %arg5[%c2_44, %c0_45, %c0_46] : memref<3x128x128xbf16, #tpu.memory_space<vmem>>, vector<1x128x128xbf16>
    %42 = vector.shape_cast %41 : vector<1x128x128xbf16> to vector<128x128xbf16>
    %cst_47 = arith.constant dense<0.000000e+00> : vector<16x128xf32>
    %43 = tpu.matmul %40, %42, %cst_47 {dimension_numbers = #tpu.dot_dimension_numbers<[1], [0], [0], [1], [0, 0, 1, 1], [], []>} : vector<16x128xbf16>, vector<128x128xbf16>, vector<16x128xf32> -> vector<16x128xf32>
    %44 = arith.addf %39, %43 : vector<16x128xf32>
    %c0_48 = arith.constant 0 : index
    %c0_49 = arith.constant 0 : index
    %45 = vector.load %arg6[%c0_48, %c0_49] : memref<1x128xf32, #tpu.memory_space<vmem>>, vector<1x128xf32>
    %46 = vector.broadcast %45 : vector<1x128xf32> to vector<16x128xf32>
    %47 = arith.addf %44, %46 : vector<16x128xf32>
    %48 = vector.shape_cast %0 : vector<1x16x128xf32> to vector<16x128xf32>
    %49 = arith.addf %47, %48 : vector<16x128xf32>
    %cst_50 = arith.constant 0.000000e+00 : f32
    %50 = vector.broadcast %cst_50 : f32 to vector<16x128xf32>
    %51 = arith.maximumf %49, %50 : vector<16x128xf32>
    %c0_51 = arith.constant 0 : index
    %c0_52 = arith.constant 0 : index
    %c0_53 = arith.constant 0 : index
    %52 = vector.load %arg7[%c0_51, %c0_52, %c0_53] : memref<1x16x128xf32, #tpu.memory_space<vmem>>, vector<1x16x128xf32>
    %53 = vector.shape_cast %52 : vector<1x16x128xf32> to vector<16x128xf32>
    %54 = vector.shape_cast %51 : vector<16x128xf32> to vector<1x16x128xf32>
    tpu.vector_store %arg7[%c0_51, %c0_52, %c0_53], %54 {strides = array<i32>} : memref<1x16x128xf32, #tpu.memory_space<vmem>>, vector<1x16x128xf32>,
    return
  }
  func.func @transform_0(%arg0: i32) -> (i32, i32, i32) {
    %c0_i32 = arith.constant 0 : i32
    %c0_i32_0 = arith.constant 0 : i32
    %c0_i32_1 = arith.constant 0 : i32
    return %arg0, %c0_i32, %c0_i32_0 : i32, i32, i32
  }
  func.func @transform_1(%arg0: i32) -> (i32, i32, i32) {
    %c0_i32 = arith.constant 0 : i32
    %c0_i32_0 = arith.constant 0 : i32
    %c0_i32_1 = arith.constant 0 : i32
    %c0_i32_2 = arith.constant 0 : i32
    return %c0_i32, %c0_i32_0, %c0_i32_1 : i32, i32, i32
  }
  func.func @transform_2(%arg0: i32) -> (i32, i32) {
    %c0_i32 = arith.constant 0 : i32
    %c0_i32_0 = arith.constant 0 : i32
    %c0_i32_1 = arith.constant 0 : i32
    return %c0_i32, %c0_i32_0 : i32, i32
  }
  func.func @transform_3(%arg0: i32) -> (i32, i32) {
    %c0_i32 = arith.constant 0 : i32
    %c0_i32_0 = arith.constant 0 : i32
    %c0_i32_1 = arith.constant 0 : i32
    return %c0_i32, %c0_i32_0 : i32, i32
  }
  func.func @transform_4(%arg0: i32) -> (i32, i32, i32) {
    %c0_i32 = arith.constant 0 : i32
    %c0_i32_0 = arith.constant 0 : i32
    %c0_i32_1 = arith.constant 0 : i32
    %c0_i32_2 = arith.constant 0 : i32
    return %c0_i32, %c0_i32_0, %c0_i32_1 : i32, i32, i32
  }
  func.func @transform_5(%arg0: i32) -> (i32, i32) {
    %c0_i32 = arith.constant 0 : i32
    %c0_i32_0 = arith.constant 0 : i32
    %c0_i32_1 = arith.constant 0 : i32
    return %c0_i32, %c0_i32_0 : i32, i32
  }
  func.func @transform_6(%arg0: i32) -> (i32, i32, i32) {
    %c0_i32 = arith.constant 0 : i32
    %c0_i32_0 = arith.constant 0 : i32
    %c0_i32_1 = arith.constant 0 : i32
    return %arg0, %c0_i32, %c0_i32_0 : i32, i32, i32
  }
}

</mosaic_0001>

<llo_original>
// kernel: tile.23
$region0: #{tile.23}
  #allocation0 [shape = 's32[1]{0}', space=sflag, size = 0x4, scoped, tag = 'scoped memory for tile.23']
  %s0 = inlined_call_operand.vmem [shape: f32[8], index: 0, kind: input, shape index: {}]
  %s1 = inlined_call_operand.vmem [shape: f32[16,8], index: 1, kind: output, shape index: {}]
  // Predicated region
  $region2: #{tile.23} parent=0 // pred_check
    _
  $region3: #{tile.23} parent=0 // pred_check_branch
    %3 = sbr.rel (0) target = $region5
  $region4: #{tile.23} parent=0 // pred_region
    _
  $region5: #{tile.23} parent=0 // pred_fallthru
    _
  %v4 = vld [vmem:[%s0] ss:$0 sm:$0xff]
  %5 = vst [vmem:[%s1] sm:$0xff] %v4
  %s6 = scalar_lea.vmem %s1, 8
  %7 = vst [vmem:[%s6] sm:$0xff] %v4

// kernel: tile.24
$region0: #{tile.24}
  %s0 = inlined_call_operand.vmem [shape: f32[16,8], index: 0, kind: input, shape index: {}]
  %s1 = inlined_call_operand.vmem [shape: f32[1,128], index: 1, kind: output, shape index: {}]
  $region1: #{tile.24} parent=0
    #allocation0 [shape = 'u8[4096]{0}', space=vmem, size = 0x1000, scoped, tag = 'scoped mem for output reshape']
    %v2 = vld [vmem:[%s0] sm:$0x1]
    %vm3 = vcmask 64512
    %4 = vst.msk [vmem:[#allocation0] sm:$0x1] %vm3, %v2
    %s5 = scalar_lea.vmem %s0, 15
    %v6 = vld [vmem:[%s5] sm:$0x1]
    %7 = vrot.lane.b32.xlu0 %v6, 120
    %v8 = vpop.permute.xlu0 %7
    %vm9 = vcmask 1048512
    %10 = vst.msk [vmem:[#allocation0] sm:$0x1] %vm9, %v8
    %s11 = scalar_lea.vmem %s0, 14
    %v12 = vld [vmem:[%s11] sm:$0x1]
    %13 = vrot.lane.b32.xlu0 %v12, 112
    %v14 = vpop.permute.xlu0 %13
    %vm15 = vcmask 982912
    %16 = vst.msk [vmem:[#allocation0] sm:$0x1] %vm15, %v14
    %s17 = scalar_lea.vmem %s0, 13
    %v18 = vld [vmem:[%s17] sm:$0x1]
    %19 = vrot.lane.b32.xlu0 %v18, 104
    %v20 = vpop.permute.xlu0 %19
    %vm21 = vcmask 917312
    %22 = vst.msk [vmem:[#allocation0] sm:$0x1] %vm21, %v20
    %s23 = scalar_lea.vmem %s0, 12
    %v24 = vld [vmem:[%s23] sm:$0x1]
    %25 = vrot.lane.b32.xlu0 %v24, 96
    %v26 = vpop.permute.xlu0 %25
    %vm27 = vcmask 851712
    %28 = vst.msk [vmem:[#allocation0] sm:$0x1] %vm27, %v26
    %s29 = scalar_lea.vmem %s0, 11
    %v30 = vld [vmem:[%s29] sm:$0x1]
    %31 = vrot.lane.b32.xlu0 %v30, 88
    %v32 = vpop.permute.xlu0 %31
    %vm33 = vcmask 786112
    %34 = vst.msk [vmem:[#allocation0] sm:$0x1] %vm33, %v32
    %s35 = scalar_lea.vmem %s0, 10
    %v36 = vld [vmem:[%s35] sm:$0x1]
    %37 = vrot.lane.b32.xlu0 %v36, 80
    %v38 = vpop.permute.xlu0 %37
    %vm39 = vcmask 720512
    %40 = vst.msk [vmem:[#allocation0] sm:$0x1] %vm39, %v38
    %s41 = scalar_lea.vmem %s0, 9
    %v42 = vld [vmem:[%s41] sm:$0x1]
    %43 = vrot.lane.b32.xlu0 %v42, 72
    %v44 = vpop.permute.xlu0 %43
    %vm45 = vcmask 654912
    %46 = vst.msk [vmem:[#allocation0] sm:$0x1] %vm45, %v44
    %s47 = scalar_lea.vmem %s0, 8
    %v48 = vld [vmem:[%s47] sm:$0x1]
    %49 = vrot.lane.b32.xlu0 %v48, 64
    %v50 = vpop.permute.xlu0 %49
    %vm51 = vcmask 589312
    %52 = vst.msk [vmem:[#allocation0] sm:$0x1] %vm51, %v50
    %s53 = scalar_lea.vmem %s0, 7
    %v54 = vld [vmem:[%s53] sm:$0x1]
    %55 = vrot.lane.b32.xlu0 %v54, 56
    %v56 = vpop.permute.xlu0 %55
    %vm57 = vcmask 523712
    %58 = vst.msk [vmem:[#allocation0] sm:$0x1] %vm57, %v56
    %s59 = scalar_lea.vmem %s0, 6
    %v60 = vld [vmem:[%s59] sm:$0x1]
    %61 = vrot.lane.b32.xlu0 %v60, 48
    %v62 = vpop.permute.xlu0 %61
    %vm63 = vcmask 458112
    %64 = vst.msk [vmem:[#allocation0] sm:$0x1] %vm63, %v62
    %s65 = scalar_lea.vmem %s0, 5
    %v66 = vld [vmem:[%s65] sm:$0x1]
    %67 = vrot.lane.b32.xlu0 %v66, 40
    %v68 = vpop.permute.xlu0 %67
    %vm69 = vcmask 392512
    %70 = vst.msk [vmem:[#allocation0] sm:$0x1] %vm69, %v68
    %s71 = scalar_lea.vmem %s0, 4
    %v72 = vld [vmem:[%s71] sm:$0x1]
    %73 = vrot.lane.b32.xlu0 %v72, 32
    %v74 = vpop.permute.xlu0 %73
    %vm75 = vcmask 326912
    %76 = vst.msk [vmem:[#allocation0] sm:$0x1] %vm75, %v74
    %s77 = scalar_lea.vmem %s0, 3
    %v78 = vld [vmem:[%s77] sm:$0x1]
    %79 = vrot.lane.b32.xlu0 %v78, 24
    %v80 = vpop.permute.xlu0 %79
    %vm81 = vcmask 261312
    %82 = vst.msk [vmem:[#allocation0] sm:$0x1] %vm81, %v80
    %s83 = scalar_lea.vmem %s0, 2
    %v84 = vld [vmem:[%s83] sm:$0x1]
    %85 = vrot.lane.b32.xlu0 %v84, 16
    %v86 = vpop.permute.xlu0 %85
    %vm87 = vcmask 195712
    %88 = vst.msk [vmem:[#allocation0] sm:$0x1] %vm87, %v86
    %s89 = scalar_lea.vmem %s0, 1
    %v90 = vld [vmem:[%s89] sm:$0x1]
    %91 = vrot.lane.b32.xlu0 %v90, 8
    %v92 = vpop.permute.xlu0 %91
    %vm93 = vcmask 130112
    %94 = vst.msk [vmem:[#allocation0] sm:$0x1] %vm93, %v92
    %s96 = sshll.u32 1, 1
    %s97 = ssub.s32 %s96, 1
    %v99 = vld [vmem:[#allocation0] sm:%s97]
    %s100 = sshll.u32 1, 1
    %s101 = ssub.s32 %s100, 1
    %102 = vst [vmem:[%s1] sm:%s101] %v99

// kernel: residual_block_nhwc.2
$region0: #{residual_block_nhwc.2}
  #allocation0 [shape = 'u32[]', space=smem, size = 0x4, offset = 0x4, fixed_abs, tag = 'smem constant byte address 0x4 - core index']
  #allocation1 [shape = 'u32[144,128]{1,0:T(1,128)}', space=vmem, size = 0x12000, scoped, tag = 'internal scratch']
  #allocation2 [shape = 'bf16[18,128]{1,0:T(8,128)(2,1)}', space=vmem, size = 0x1800, scoped, tag = 'scratch operand']
  %s0 = inlined_call_operand.vmem [shape: f32[2,16,128], index: 0, kind: input, shape index: {}]
  %s1 = inlined_call_operand.vmem [shape: bf16[3,128,128], index: 1, kind: input, shape index: {}]
  %s2 = inlined_call_operand.vmem [shape: f32[2,2,128], index: 2, kind: output, shape index: {}]
  %s3 = sld [smem:[#allocation0]]
  $region41: #{residual_block_nhwc.2} parent=0
    _
  %s5 = ssub.s32 1, %s3
  %s6 = scalar_select 0, %s5, %s3
  loop: start=0, step=1, limit=4
  $region2: #{residual_block_nhwc.2} parent=0 // loop_pre_header
    _
  $region3: #{residual_block_nhwc.2} parent=0 // loop_header
    %s8 = sphi 0, %s12
    %p9 = scmp.ge.s32.totalorder %s8, 4
    %s18 = sphi 0, %s20
    %s21 = sphi 0, %s18
    %s22 = sphi 0, %s21
    %s38 = sphi 0, %s22
    %s42 = sphi 0, %s42
    %s44 = sphi 0, %s42
    %s45 = sphi 0, %s44
    %s59 = sphi 0, %s45
    %s65 = sphi 0, %s67
    %s68 = sphi 0, %s65
    %s69 = sphi 0, %s68
    %s85 = sphi 0, %s69
  $region4: #{residual_block_nhwc.2} parent=0 // loop_header_branch
    %11 = sbr.rel (%p9) target = $region8
  $region5: #{residual_block_nhwc.2} parent=0 // loop_body
    %s13 = ssub.s32 %s8, 1
    %s14 = ssub.s32 %s8, 2
    %s15 = sadd.s32 %s8, 1
    %s16 = ssub.s32 %s8, %s15
    %p17 = scmp.eq.s32.totalorder %s16, 0
    %s19 = sadd.s32 %s18, 1
    %s20 = scalar_select %p17, %s18, %s19
    %p23 = pneg %p17
    %p24 = scmp.eq.s32.totalorder %s8, 1
    %p25 = por %p23, %p24
    %p26 = scmp.ne.s32.totalorder %s18, %s21
    %p27 = scmp.eq.s32.totalorder %s8, 0
    %p28 = por %p26, %p27
    %p29 = scmp.ne.s32.totalorder %s18, %s21
    %p30 = scmp.eq.s32.totalorder %s13, 1
    %p31 = por %p29, %p30
    %p32 = scmp.ne.s32.totalorder %s21, %s22
    %p33 = scmp.eq.s32.totalorder %s13, 0
    %p34 = por %p32, %p33
    %p35 = scmp.ne.s32.totalorder %s21, %s22
    %p36 = scmp.eq.s32.totalorder %s14, 1
    %p37 = por %p35, %p36
    %p39 = scmp.ne.s32.totalorder %s22, %s38
    %p40 = scmp.eq.s32.totalorder %s14, 0
    %p41 = por %p39, %p40
    %s43 = sadd.s32 %s42, 1
    %p46 = scmp.eq.s32.totalorder %s8, 1
    %p47 = scmp.ne.s32.totalorder %s42, %s44
    %p48 = scmp.eq.s32.totalorder %s8, 0
    %p49 = por %p47, %p48
    %p50 = scmp.ne.s32.totalorder %s42, %s44
    %p51 = scmp.eq.s32.totalorder %s13, 1
    %p52 = por %p50, %p51
    %p53 = scmp.ne.s32.totalorder %s44, %s45
    %p54 = scmp.eq.s32.totalorder %s13, 0
    %p55 = por %p53, %p54
    %p56 = scmp.ne.s32.totalorder %s44, %s45
    %p57 = scmp.eq.s32.totalorder %s14, 1
    %p58 = por %p56, %p57
    %p60 = scmp.ne.s32.totalorder %s45, %s59
    %p61 = scmp.eq.s32.totalorder %s14, 0
    %p62 = por %p60, %p61
    %s63 = ssub.s32 %s8, %s15
    %p64 = scmp.eq.s32.totalorder %s63, 0
    %s66 = sadd.s32 %s65, 1
    %s67 = scalar_select %p64, %s65, %s66
    %p70 = pneg %p64
    %p71 = scmp.eq.s32.totalorder %s8, 1
    %p72 = por %p70, %p71
    %p73 = scmp.ne.s32.totalorder %s65, %s68
    %p74 = scmp.eq.s32.totalorder %s8, 0
    %p75 = por %p73, %p74
    %p76 = scmp.ne.s32.totalorder %s65, %s68
    %p77 = scmp.eq.s32.totalorder %s13, 1
    %p78 = por %p76, %p77
    %p79 = scmp.ne.s32.totalorder %s68, %s69
    %p80 = scmp.eq.s32.totalorder %s13, 0
    %p81 = por %p79, %p80
    %p82 = scmp.ne.s32.totalorder %s68, %s69
    %p83 = scmp.eq.s32.totalorder %s14, 1
    %p84 = por %p82, %p83
    %p86 = scmp.ne.s32.totalorder %s69, %s85
    %p87 = scmp.eq.s32.totalorder %s14, 0
    %p88 = por %p86, %p87
    %p89 = scmp.le.s32.totalorder 1, %s8
    %p90 = scmp.lt.s32.totalorder %s8, 3
    %p91 = pnand %p89, %p90
    %p92 = pneg %p91
    // Predicated region
    $region9: #{residual_block_nhwc.2} parent=5 // pred_check
      _
    $region10: #{residual_block_nhwc.2} parent=5 // pred_check_branch
      %94 = sbr.rel (%p91) target = $region12
    $region11: #{residual_block_nhwc.2} parent=5 // pred_region
      %s95 = ssub.s32 %s8, 1
      // Predicated region
      $region13: #{residual_block_nhwc.2} parent=11 // pred_check
        %p96 = pneg %p55
      $region14: #{residual_block_nhwc.2} parent=11 // pred_check_branch
        %98 = sbr.rel (%p96) target = $region16
      $region15: #{residual_block_nhwc.2} parent=11 // pred_region
        _
      $region16: #{residual_block_nhwc.2} parent=11 // pred_fallthru
        _
    $region12: #{residual_block_nhwc.2} parent=5 // pred_fallthru
      _
    %p99 = scmp.lt.s32.totalorder %s8, 2
    // Predicated region
    $region17: #{residual_block_nhwc.2} parent=5 // pred_check
      %p100 = pneg %p99
    $region18: #{residual_block_nhwc.2} parent=5 // pred_check_branch
      %102 = sbr.rel (%p100) target = $region20
    $region19: #{residual_block_nhwc.2} parent=5 // pred_region
      // Predicated region
      $region21: #{residual_block_nhwc.2} parent=19 // pred_check
        %p103 = pneg %p28
      $region22: #{residual_block_nhwc.2} parent=19 // pred_check_branch
        %105 = sbr.rel (%p103) target = $region24
      $region23: #{residual_block_nhwc.2} parent=19 // pred_region
        %p106 = scmp.lt.s32.totalorder %s8, 1
        %s107 = scalar_select %p106, %s8, 1
        %s108 = smul.addr %s107, 2
        %s109 = smul.addr %s108, 8
        %s110 = scalar_lea.vmem %s0, %s109
      $region24: #{residual_block_nhwc.2} parent=19 // pred_fallthru
        _
    $region20: #{residual_block_nhwc.2} parent=5 // pred_fallthru
      _
    %p111 = scmp.le.s32.totalorder 1, %s8
    %p112 = scmp.lt.s32.totalorder %s8, 3
    %p113 = pnand %p111, %p112
    %p114 = pneg %p113
    // Predicated region
    $region25: #{residual_block_nhwc.2} parent=5 // pred_check
      _
    $region26: #{residual_block_nhwc.2} parent=5 // pred_check_branch
      %116 = sbr.rel (%p113) target = $region28
    $region27: #{residual_block_nhwc.2} parent=5 // pred_region
      %s117 = ssub.s32 %s8, 1
      %p118 = scmp.lt.s32.totalorder %s13, 1
      %s119 = scalar_select %p118, %s13, 1
      %s120 = smul.addr %s119, 2
      %s121 = smul.addr %s120, 8
      %s122 = scalar_lea.vmem %s0, %s121
      %p123 = pneg %p34
      %p124 = pneg %p31
      %p125 = pneg %p55
      %p126 = pneg %p52
      %p127 = pneg %p81
      %p128 = pneg %p78
      %p129 = scmp.lt.s32.totalorder %s13, 1
      %s130 = scalar_select %p129, %s13, 1
      %s131 = smul.addr %s130, 2
      %s132 = scalar_lea.vmem %s2, %s131
      %p133 = scmp.lt.s32.totalorder %s13, 1
      %s134 = scalar_select %p133, %s13, 1
      %s135 = smul.addr %s134, 2
      %s136 = smul.addr %s135, 8
      %s137 = scalar_lea.vmem %s0, %s136
      %p138 = scmp.lt.s32.totalorder %s13, 1
      %s139 = scalar_select %p138, %s13, 1
      %s140 = smul.addr %s139, 2
      %s141 = scalar_lea.vmem %s2, %s140
      %v143 = vld [vmem:[%s137] sm:$0xff]
      %v144 = vld [vmem:[%s137 + $0x8] sm:$0xff]
      %v145 = vpack.c.bf16 %v144, %v143
      %vm146 = vcmask 1040384
      %vm147 = vsmask.f32 256
      %vm148 = vmand %vm146, %vm147
      %v149 = vld [vmem:[#allocation2] sm:$0x1]
      %v150 = vsel %vm148, 0, %v149
      %151 = vst [vmem:[#allocation2] sm:$0x1] %v150
      %vm152 = vsmask.f32 7938
      %vm153 = vmand %vm146, %vm152
      %v154 = vld [vmem:[#allocation2 + $0x8] sm:$0x1]
      %v155 = vsel %vm153, 0, %v154
      %156 = vst [vmem:[#allocation2 + $0x8] sm:$0x1] %v155
      %v158 = vunpack.c.l.b16 %v145
      %v159 = vunpack.c.h.b16 %v145
      %v160 = vpack.c.b16 %v158, %v158
      %v161 = vpack.c.b16 %v159, %v159
      %vm162 = vsmask.f32 4368
      %vm163 = vmor %vm147, %vm162
      %v165 = vshrl.u32 %v160, 16
      %v167 = vrot.slane %v165, 7
      %v168 = vshll.u32 %v160, 16
      %v170 = vor.u32 %v167, %v168
      %v171 = vrot.slane %v167, 4
      %v173 = vshrl.u32 %v161, 16
      %v175 = vrot.slane %v173, 7
      %v176 = vshll.u32 %v161, 16
      %v178 = vor.u32 %v175, %v176
      %v179 = vsel %vm163, %v171, %v178
      %v180 = vrot.slane %v175, 4
      %vm184 = vcmask 1043456
      %vm185 = vmand %vm184, %vm152
      %v186 = vld [vmem:[#allocation2] sm:$0xf]
      %v187 = vsel %vm185, %v170, %v186
      %188 = vst [vmem:[#allocation2] sm:$0xf] %v187
      %189 = vst [vmem:[#allocation2 + $0x4] sm:$0xf] %v179
      %v190 = vld [vmem:[#allocation2 + $0x8] sm:$0x1]
      %v191 = vsel %vm148, %v180, %v190
      %192 = vst [vmem:[#allocation2 + $0x8] sm:$0x1] %v191
      %v193 = vld [vmem:[#allocation2] sm:$0xf]
      %v194 = vld [vmem:[#allocation2 + $0x4] sm:$0xf]
      %v195 = vld [vmem:[%s1] sm:$0xf]
      %v196 = vld [vmem:[%s1 + $0x4] sm:$0xf]
      %v197 = vld [vmem:[%s1 + $0x8] sm:$0xf]
      %v198 = vld [vmem:[%s1 + $0xc] sm:$0xf]
      %v199 = vld [vmem:[%s1 + $0x10] sm:$0xf]
      %v200 = vld [vmem:[%s1 + $0x14] sm:$0xf]
      %v201 = vld [vmem:[%s1 + $0x18] sm:$0xf]
      %v202 = vld [vmem:[%s1 + $0x1c] sm:$0xf]
      %v203 = vld [vmem:[%s1 + $0x20] sm:$0xf]
      %v204 = vld [vmem:[%s1 + $0x24] sm:$0xf]
      %v205 = vld [vmem:[%s1 + $0x28] sm:$0xf]
      %v206 = vld [vmem:[%s1 + $0x2c] sm:$0xf]
      %v207 = vld [vmem:[%s1 + $0x30] sm:$0xf]
      %v208 = vld [vmem:[%s1 + $0x34] sm:$0xf]
      %v209 = vld [vmem:[%s1 + $0x38] sm:$0xf]
      %v210 = vld [vmem:[%s1 + $0x3c] sm:$0xf]
      %v211 = vld [vmem:[#allocation2 + $0x8] sm:$0x1]
      %s212 = scalar_lea.vmem %s1, 64
      %v213 = vld [vmem:[%s212] sm:$0xf]
      %v214 = vld [vmem:[%s212 + $0x4] sm:$0xf]
      %v215 = vld [vmem:[%s212 + $0x8] sm:$0xf]
      %v216 = vld [vmem:[%s212 + $0xc] sm:$0xf]
      %v217 = vld [vmem:[%s212 + $0x10] sm:$0xf]
      %v218 = vld [vmem:[%s212 + $0x14] sm:$0xf]
      %v219 = vld [vmem:[%s212 + $0x18] sm:$0xf]
      %v220 = vld [vmem:[%s212 + $0x1c] sm:$0xf]
      %v221 = vld [vmem:[%s212 + $0x20] sm:$0xf]
      %v222 = vld [vmem:[%s212 + $0x24] sm:$0xf]
      %v223 = vld [vmem:[%s212 + $0x28] sm:$0xf]
      %v224 = vld [vmem:[%s212 + $0x2c] sm:$0xf]
      %v225 = vld [vmem:[%s212 + $0x30] sm:$0xf]
      %v226 = vld [vmem:[%s212 + $0x34] sm:$0xf]
      %v227 = vld [vmem:[%s212 + $0x38] sm:$0xf]
      %v228 = vld [vmem:[%s212 + $0x3c] sm:$0xf]
      %v232 = vunpack.c.l.b16 %v193
      %v233 = vunpack.c.l.b16 %v194
      %v234 = vunpack.c.l.b16 %v211
      %v235 = vpack.c.b16 %v233, %v232
      %v236 = vpack.c.b16 %v234, %v234
      %vm237 = vsmask.f32 7424
      %v239 = vshrl.u32 %v235, 16
      %v241 = vshll.u32 %v235, 16
      %v243 = vrot.slane %v241, 1
      %v244 = vor.u32 %v239, %v243
      %v246 = vshll.u32 %v236, 16
      %v248 = vrot.slane %v246, 1
      %v249 = vsel %vm237, %v244, %v248
      %v267 = vunpack.c.l.b16 %v213
      %v268 = vunpack.c.l.b16 %v214
      %v269 = vunpack.c.l.b16 %v215
      %v270 = vunpack.c.l.b16 %v216
      %v271 = vunpack.c.l.b16 %v217
      %v272 = vunpack.c.l.b16 %v218
      %v273 = vunpack.c.l.b16 %v219
      %v274 = vunpack.c.l.b16 %v220
      %v275 = vunpack.c.l.b16 %v221
      %v276 = vunpack.c.l.b16 %v222
      %v277 = vunpack.c.l.b16 %v223
      %v278 = vunpack.c.l.b16 %v224
      %v279 = vunpack.c.l.b16 %v225
      %v280 = vunpack.c.l.b16 %v226
      %v281 = vunpack.c.l.b16 %v227
      %v282 = vunpack.c.l.b16 %v228
      %v283 = vpack.c.b16 %v268, %v267
      %v284 = vpack.c.b16 %v270, %v269
      %v285 = vpack.c.b16 %v272, %v271
      %v286 = vpack.c.b16 %v274, %v273
      %v287 = vpack.c.b16 %v276, %v275
      %v288 = vpack.c.b16 %v278, %v277
      %v289 = vpack.c.b16 %v280, %v279
      %v290 = vpack.c.b16 %v282, %v281
      %299 = vmatprep.subr.bf16.mxu0 0
      %300 = vmatpush1.bf16.msra.mxu0 %v290
      %301 = vmatprep.subr.bf16.mxu0 0
      %302 = vmatpush1.bf16.msra.mxu0 %v289
      %303 = vmatprep.subr.bf16.mxu0 0
      %304 = vmatpush1.bf16.msra.mxu0 %v288
      %305 = vmatprep.subr.bf16.mxu0 0
      %306 = vmatpush1.bf16.msra.mxu0 %v287
      %307 = vmatprep.subr.bf16.mxu0 0
      %308 = vmatpush1.bf16.msra.mxu0 %v286
      %309 = vmatprep.subr.bf16.mxu0 0
      %310 = vmatpush1.bf16.msra.mxu0 %v285
      %311 = vmatprep.subr.bf16.mxu0 0
      %312 = vmatpush1.bf16.msra.mxu0 %v284
      %313 = vmatprep.subr.bf16.mxu0 0
      %314 = vmatpush1.bf16.msra.mxu0 %v283
      %315 = vmatprep.subr.bf16.mxu0 0
      %316 = vmatpush2.bf16.msra.mxu0 0
      %317 = vmatprep.subr.bf16.mxu0 0
      %318 = vmatpush2.bf16.msra.mxu0 0
      %319 = vmatprep.subr.bf16.mxu0 0
      %320 = vmatpush2.bf16.msra.mxu0 0
      %321 = vmatprep.subr.bf16.mxu0 0
      %322 = vmatpush2.bf16.msra.mxu0 0
      %323 = vmatprep.subr.bf16.mxu0 0
      %324 = vmatpush2.bf16.msra.mxu0 0
      %325 = vmatprep.subr.bf16.mxu0 0
      %326 = vmatpush2.bf16.msra.mxu0 0
      %327 = vmatprep.subr.bf16.mxu0 0
      %328 = vmatpush2.bf16.msra.mxu0 0
      %329 = vmatprep.subr.bf16.mxu0 0
      %330 = vmatpush2.bf16.msra.mxu0 0
      %331 = vmatprep.mubr.bf16.mxu0 0
      %332 = vmatmul.mubr.bf16.gmra.mxu0 %v249
      %v333 = vpop.f32.mrf.mxu0
      %v334 = vadd.f32 0.0, %v333
      %v335 = vpop.f32.mrf.mxu0
      %v336 = vpop.f32.mrf.mxu0
      %v337 = vadd.f32 0.0, %v336
      %v338 = vpop.f32.mrf.mxu0
      %339 = vdwg.mxu0
      %v357 = vunpack.c.l.b16 %v195
      %v358 = vunpack.c.l.b16 %v196
      %v359 = vunpack.c.l.b16 %v197
      %v360 = vunpack.c.l.b16 %v198
      %v361 = vunpack.c.l.b16 %v199
      %v362 = vunpack.c.l.b16 %v200
      %v363 = vunpack.c.l.b16 %v201
      %v364 = vunpack.c.l.b16 %v202
      %v365 = vunpack.c.l.b16 %v203
      %v366 = vunpack.c.l.b16 %v204
      %v367 = vunpack.c.l.b16 %v205
      %v368 = vunpack.c.l.b16 %v206
      %v369 = vunpack.c.l.b16 %v207
      %v370 = vunpack.c.l.b16 %v208
      %v371 = vunpack.c.l.b16 %v209
      %v372 = vunpack.c.l.b16 %v210
      %v373 = vpack.c.b16 %v358, %v357
      %v374 = vpack.c.b16 %v360, %v359
      %v375 = vpack.c.b16 %v362, %v361
      %v376 = vpack.c.b16 %v364, %v363
      %v377 = vpack.c.b16 %v366, %v365
      %v378 = vpack.c.b16 %v368, %v367
      %v379 = vpack.c.b16 %v370, %v369
      %v380 = vpack.c.b16 %v372, %v371
      %389 = vmatprep.subr.bf16.mxu0 0
      %390 = vmatpush1.bf16.msra.mxu0 %v380
      %391 = vmatprep.subr.bf16.mxu0 0
      %392 = vmatpush1.bf16.msra.mxu0 %v379
      %393 = vmatprep.subr.bf16.mxu0 0
      %394 = vmatpush1.bf16.msra.mxu0 %v378
      %395 = vmatprep.subr.bf16.mxu0 0
      %396 = vmatpush1.bf16.msra.mxu0 %v377
      %397 = vmatprep.subr.bf16.mxu0 0
      %398 = vmatpush1.bf16.msra.mxu0 %v376
      %399 = vmatprep.subr.bf16.mxu0 0
      %400 = vmatpush1.bf16.msra.mxu0 %v375
      %401 = vmatprep.subr.bf16.mxu0 0
      %402 = vmatpush1.bf16.msra.mxu0 %v374
      %403 = vmatprep.subr.bf16.mxu0 0
      %404 = vmatpush1.bf16.msra.mxu0 %v373
      %405 = vmatprep.subr.bf16.mxu0 0
      %406 = vmatpush2.bf16.msra.mxu0 0
      %407 = vmatprep.subr.bf16.mxu0 0
      %408 = vmatpush2.bf16.msra.mxu0 0
      %409 = vmatprep.subr.bf16.mxu0 0
      %410 = vmatpush2.bf16.msra.mxu0 0
      %411 = vmatprep.subr.bf16.mxu0 0
      %412 = vmatpush2.bf16.msra.mxu0 0
      %413 = vmatprep.subr.bf16.mxu0 0
      %414 = vmatpush2.bf16.msra.mxu0 0
      %415 = vmatprep.subr.bf16.mxu0 0
      %416 = vmatpush2.bf16.msra.mxu0 0
      %417 = vmatprep.subr.bf16.mxu0 0
      %418 = vmatpush2.bf16.msra.mxu0 0
      %419 = vmatprep.subr.bf16.mxu0 0
      %420 = vmatpush2.bf16.msra.mxu0 0
      %421 = vmatprep.mubr.bf16.mxu0 0
      %422 = vmatmul.mubr.bf16.gmra.mxu0 %v235
      %v423 = vpop.f32.mrf.mxu0
      %v424 = vadd.f32 %v334, %v423
      %v425 = vpop.f32.mrf.mxu0
      %v426 = vpop.f32.mrf.mxu0
      %v427 = vadd.f32 %v337, %v426
      %v428 = vpop.f32.mrf.mxu0
      %429 = vdwg.mxu0
      %v430 = vld [vmem:[#allocation2] sm:$0xe]
      %s431 = scalar_lea.vmem %s1, 128
      %v432 = vld [vmem:[%s431] sm:$0xf]
      %v433 = vld [vmem:[%s431 + $0x4] sm:$0xf]
      %v434 = vld [vmem:[%s431 + $0x8] sm:$0xf]
      %v435 = vld [vmem:[%s431 + $0xc] sm:$0xf]
      %v436 = vld [vmem:[%s431 + $0x10] sm:$0xf]
      %v437 = vld [vmem:[%s431 + $0x14] sm:$0xf]
      %v438 = vld [vmem:[%s431 + $0x18] sm:$0xf]
      %v439 = vld [vmem:[%s431 + $0x1c] sm:$0xf]
      %v440 = vld [vmem:[%s431 + $0x20] sm:$0xf]
      %v441 = vld [vmem:[%s431 + $0x24] sm:$0xf]
      %v442 = vld [vmem:[%s431 + $0x28] sm:$0xf]
      %v443 = vld [vmem:[%s431 + $0x2c] sm:$0xf]
      %v444 = vld [vmem:[%s431 + $0x30] sm:$0xf]
      %v445 = vld [vmem:[%s431 + $0x34] sm:$0xf]
      %v446 = vld [vmem:[%s431 + $0x38] sm:$0xf]
      %v447 = vld [vmem:[%s431 + $0x3c] sm:$0xf]
      %v449 = vunpack.c.l.b16 %v430
      %v450 = vpack.c.b16 %v233, %v449
      %vm451 = vcmask 1046528
      %v452 = vrot.slane %v450, 1
      %v453 = vrot.slane %v236, 1
      %v454 = vsel %vm451, %v452, %v453
      %v472 = vunpack.c.l.b16 %v432
      %v473 = vunpack.c.l.b16 %v433
      %v474 = vunpack.c.l.b16 %v434
      %v475 = vunpack.c.l.b16 %v435
      %v476 = vunpack.c.l.b16 %v436
      %v477 = vunpack.c.l.b16 %v437
      %v478 = vunpack.c.l.b16 %v438
      %v479 = vunpack.c.l.b16 %v439
      %v480 = vunpack.c.l.b16 %v440
      %v481 = vunpack.c.l.b16 %v441
      %v482 = vunpack.c.l.b16 %v442
      %v483 = vunpack.c.l.b16 %v443
      %v484 = vunpack.c.l.b16 %v444
      %v485 = vunpack.c.l.b16 %v445
      %v486 = vunpack.c.l.b16 %v446
      %v487 = vunpack.c.l.b16 %v447
      %v488 = vpack.c.b16 %v473, %v472
      %v489 = vpack.c.b16 %v475, %v474
      %v490 = vpack.c.b16 %v477, %v476
      %v491 = vpack.c.b16 %v479, %v478
      %v492 = vpack.c.b16 %v481, %v480
      %v493 = vpack.c.b16 %v483, %v482
      %v494 = vpack.c.b16 %v485, %v484
      %v495 = vpack.c.b16 %v487, %v486
      %504 = vmatprep.subr.bf16.mxu0 0
      %505 = vmatpush1.bf16.msra.mxu0 %v495
      %506 = vmatprep.subr.bf16.mxu0 0
      %507 = vmatpush1.bf16.msra.mxu0 %v494
      %508 = vmatprep.subr.bf16.mxu0 0
      %509 = vmatpush1.bf16.msra.mxu0 %v493
      %510 = vmatprep.subr.bf16.mxu0 0
      %511 = vmatpush1.bf16.msra.mxu0 %v492
      %512 = vmatprep.subr.bf16.mxu0 0
      %513 = vmatpush1.bf16.msra.mxu0 %v491
      %514 = vmatprep.subr.bf16.mxu0 0
      %515 = vmatpush1.bf16.msra.mxu0 %v490
      %516 = vmatprep.subr.bf16.mxu0 0
      %517 = vmatpush1.bf16.msra.mxu0 %v489
      %518 = vmatprep.subr.bf16.mxu0 0
      %519 = vmatpush1.bf16.msra.mxu0 %v488
      %520 = vmatprep.subr.bf16.mxu0 0
      %521 = vmatpush2.bf16.msra.mxu0 0
      %522 = vmatprep.subr.bf16.mxu0 0
      %523 = vmatpush2.bf16.msra.mxu0 0
      %524 = vmatprep.subr.bf16.mxu0 0
      %525 = vmatpush2.bf16.msra.mxu0 0
      %526 = vmatprep.subr.bf16.mxu0 0
      %527 = vmatpush2.bf16.msra.mxu0 0
      %528 = vmatprep.subr.bf16.mxu0 0
      %529 = vmatpush2.bf16.msra.mxu0 0
      %530 = vmatprep.subr.bf16.mxu0 0
      %531 = vmatpush2.bf16.msra.mxu0 0
      %532 = vmatprep.subr.bf16.mxu0 0
      %533 = vmatpush2.bf16.msra.mxu0 0
      %534 = vmatprep.subr.bf16.mxu0 0
      %535 = vmatpush2.bf16.msra.mxu0 0
      %536 = vmatprep.mubr.bf16.mxu0 0
      %537 = vmatmul.mubr.bf16.gmra.mxu0 %v454
      %v538 = vpop.f32.mrf.mxu0
      %v539 = vadd.f32 0.0, %v538
      %v540 = vpop.f32.mrf.mxu0
      %v541 = vpop.f32.mrf.mxu0
      %v542 = vadd.f32 0.0, %v541
      %v543 = vpop.f32.mrf.mxu0
      %544 = vdwg.mxu0
      %v545 = vadd.f32 %v424, %v539
      %v546 = vadd.f32 %v427, %v542
      %v547 = vadd.f32 %v545, %v546
      %v548 = vrot.slane %v547, 4
      %v549 = vadd.f32 %v547, %v548
      %v550 = vrot.slane %v549, 2
      %v551 = vadd.f32 %v549, %v550
      %v552 = vrot.slane %v551, 1
      %v553 = vadd.f32 %v551, %v552
      %v554 = vadd.f32 %v553, 0.0
      %v555 = vmul.f32 %v545, %v545
      %v556 = vmul.f32 %v546, %v546
      %v557 = vadd.f32 %v555, %v556
      %v558 = vrot.slane %v557, 4
      %v559 = vadd.f32 %v557, %v558
      %v560 = vrot.slane %v559, 2
      %v561 = vadd.f32 %v559, %v560
      %v562 = vrot.slane %v561, 1
      %v563 = vadd.f32 %v561, %v562
      %v564 = vadd.f32 %v563, 0.0
      %vm565 = vcmask 1040384
      %v566 = vsel %vm565, %v554, %v564
      %567 = vst [vmem:[%s141] sm:$0x3] %v566
      %p568 = scmp.lt.s32.totalorder %s13, 1
      %s569 = scalar_select %p568, %s13, 1
      %s570 = smul.addr %s569, 2
      %s571 = scalar_lea.vmem %s2, %s570
      // Predicated region
      $region29: #{residual_block_nhwc.2} parent=27 // pred_check
        %p572 = pneg %p78
      $region30: #{residual_block_nhwc.2} parent=27 // pred_check_branch
        %574 = sbr.rel (%p572) target = $region32
      $region31: #{residual_block_nhwc.2} parent=27 // pred_region
        _
      $region32: #{residual_block_nhwc.2} parent=27 // pred_fallthru
        _
    $region28: #{residual_block_nhwc.2} parent=5 // pred_fallthru
      _
    %p575 = scmp.le.s32.totalorder 2, %s8
    // Predicated region
    $region33: #{residual_block_nhwc.2} parent=5 // pred_check
      %p576 = pneg %p575
    $region34: #{residual_block_nhwc.2} parent=5 // pred_check_branch
      %578 = sbr.rel (%p576) target = $region36
    $region35: #{residual_block_nhwc.2} parent=5 // pred_region
      %s579 = ssub.s32 %s8, 2
      // Predicated region
      $region37: #{residual_block_nhwc.2} parent=35 // pred_check
        %p580 = pneg %p84
      $region38: #{residual_block_nhwc.2} parent=35 // pred_check_branch
        %582 = sbr.rel (%p580) target = $region40
      $region39: #{residual_block_nhwc.2} parent=35 // pred_region
        %p583 = scmp.lt.s32.totalorder %s14, 1
        %s584 = scalar_select %p583, %s14, 1
        %s585 = smul.addr %s584, 2
        %s586 = scalar_lea.vmem %s2, %s585
      $region40: #{residual_block_nhwc.2} parent=35 // pred_fallthru
        _
    $region36: #{residual_block_nhwc.2} parent=5 // pred_fallthru
      _
  $region6: #{residual_block_nhwc.2} parent=0 // loop_footer
    %s12 = sadd.s32 1, %s8
  $region7: #{residual_block_nhwc.2} parent=0 // loop_footer_branch
    %7 = sbr.rel target = $region3
  $region8: #{residual_block_nhwc.2} parent=0 // loop_exit
    _

// kernel: residual_block_nhwc.3
$region0: #{residual_block_nhwc.3}
  #allocation0 [shape = 'u32[]', space=smem, size = 0x4, offset = 0x4, fixed_abs, tag = 'smem constant byte address 0x4 - core index']
  #allocation1 [shape = 'u32[144,128]{1,0:T(1,128)}', space=vmem, size = 0x12000, scoped, tag = 'internal scratch']
  #allocation2 [shape = 'bf16[18,128]{1,0:T(8,128)(2,1)}', space=vmem, size = 0x1800, scoped, tag = 'scratch operand']
  %s0 = inlined_call_operand.vmem [shape: f32[2,16,128], index: 0, kind: input, shape index: {}]
  %s1 = inlined_call_operand.vmem [shape: bf16[3,128,128], index: 1, kind: input, shape index: {}]
  %s2 = inlined_call_operand.vmem [shape: f32[1,128], index: 2, kind: input, shape index: {}]
  %s3 = inlined_call_operand.vmem [shape: f32[1,128], index: 3, kind: input, shape index: {}]
  %s4 = inlined_call_operand.vmem [shape: bf16[3,128,128], index: 4, kind: input, shape index: {}]
  %s5 = inlined_call_operand.vmem [shape: f32[1,128], index: 5, kind: input, shape index: {}]
  %s6 = inlined_call_operand.vmem [shape: f32[2,16,128], index: 6, kind: output, shape index: {}]
  %s7 = sld [smem:[#allocation0]]
  $region57: #{residual_block_nhwc.3} parent=0
    _
  %s9 = ssub.s32 1, %s7
  %s10 = scalar_select 0, %s9, %s7
  loop: start=0, step=1, limit=4
  $region2: #{residual_block_nhwc.3} parent=0 // loop_pre_header
    _
  $region3: #{residual_block_nhwc.3} parent=0 // loop_header
    %s12 = sphi 0, %s16
    %p13 = scmp.ge.s32.totalorder %s12, 4
    %s22 = sphi 0, %s24
    %s25 = sphi 0, %s22
    %s26 = sphi 0, %s25
    %s42 = sphi 0, %s26
    %s46 = sphi 0, %s46
    %s48 = sphi 0, %s46
    %s49 = sphi 0, %s48
    %s63 = sphi 0, %s49
    %s67 = sphi 0, %s67
    %s69 = sphi 0, %s67
    %s70 = sphi 0, %s69
    %s84 = sphi 0, %s70
    %s88 = sphi 0, %s88
    %s90 = sphi 0, %s88
    %s91 = sphi 0, %s90
    %s105 = sphi 0, %s91
    %s109 = sphi 0, %s109
    %s111 = sphi 0, %s109
    %s112 = sphi 0, %s111
    %s126 = sphi 0, %s112
    %s130 = sphi 0, %s130
    %s132 = sphi 0, %s130
    %s133 = sphi 0, %s132
    %s147 = sphi 0, %s133
    %s153 = sphi 0, %s155
    %s156 = sphi 0, %s153
    %s157 = sphi 0, %s156
    %s173 = sphi 0, %s157
  $region4: #{residual_block_nhwc.3} parent=0 // loop_header_branch
    %15 = sbr.rel (%p13) target = $region8
  $region5: #{residual_block_nhwc.3} parent=0 // loop_body
    %s17 = ssub.s32 %s12, 1
    %s18 = ssub.s32 %s12, 2
    %s19 = sadd.s32 %s12, 1
    %s20 = ssub.s32 %s12, %s19
    %p21 = scmp.eq.s32.totalorder %s20, 0
    %s23 = sadd.s32 %s22, 1
    %s24 = scalar_select %p21, %s22, %s23
    %p27 = pneg %p21
    %p28 = scmp.eq.s32.totalorder %s12, 1
    %p29 = por %p27, %p28
    %p30 = scmp.ne.s32.totalorder %s22, %s25
    %p31 = scmp.eq.s32.totalorder %s12, 0
    %p32 = por %p30, %p31
    %p33 = scmp.ne.s32.totalorder %s22, %s25
    %p34 = scmp.eq.s32.totalorder %s17, 1
    %p35 = por %p33, %p34
    %p36 = scmp.ne.s32.totalorder %s25, %s26
    %p37 = scmp.eq.s32.totalorder %s17, 0
    %p38 = por %p36, %p37
    %p39 = scmp.ne.s32.totalorder %s25, %s26
    %p40 = scmp.eq.s32.totalorder %s18, 1
    %p41 = por %p39, %p40
    %p43 = scmp.ne.s32.totalorder %s26, %s42
    %p44 = scmp.eq.s32.totalorder %s18, 0
    %p45 = por %p43, %p44
    %s47 = sadd.s32 %s46, 1
    %p50 = scmp.eq.s32.totalorder %s12, 1
    %p51 = scmp.ne.s32.totalorder %s46, %s48
    %p52 = scmp.eq.s32.totalorder %s12, 0
    %p53 = por %p51, %p52
    %p54 = scmp.ne.s32.totalorder %s46, %s48
    %p55 = scmp.eq.s32.totalorder %s17, 1
    %p56 = por %p54, %p55
    %p57 = scmp.ne.s32.totalorder %s48, %s49
    %p58 = scmp.eq.s32.totalorder %s17, 0
    %p59 = por %p57, %p58
    %p60 = scmp.ne.s32.totalorder %s48, %s49
    %p61 = scmp.eq.s32.totalorder %s18, 1
    %p62 = por %p60, %p61
    %p64 = scmp.ne.s32.totalorder %s49, %s63
    %p65 = scmp.eq.s32.totalorder %s18, 0
    %p66 = por %p64, %p65
    %s68 = sadd.s32 %s67, 1
    %p71 = scmp.eq.s32.totalorder %s12, 1
    %p72 = scmp.ne.s32.totalorder %s67, %s69
    %p73 = scmp.eq.s32.totalorder %s12, 0
    %p74 = por %p72, %p73
    %p75 = scmp.ne.s32.totalorder %s67, %s69
    %p76 = scmp.eq.s32.totalorder %s17, 1
    %p77 = por %p75, %p76
    %p78 = scmp.ne.s32.totalorder %s69, %s70
    %p79 = scmp.eq.s32.totalorder %s17, 0
    %p80 = por %p78, %p79
    %p81 = scmp.ne.s32.totalorder %s69, %s70
    %p82 = scmp.eq.s32.totalorder %s18, 1
    %p83 = por %p81, %p82
    %p85 = scmp.ne.s32.totalorder %s70, %s84
    %p86 = scmp.eq.s32.totalorder %s18, 0
    %p87 = por %p85, %p86
    %s89 = sadd.s32 %s88, 1
    %p92 = scmp.eq.s32.totalorder %s12, 1
    %p93 = scmp.ne.s32.totalorder %s88, %s90
    %p94 = scmp.eq.s32.totalorder %s12, 0
    %p95 = por %p93, %p94
    %p96 = scmp.ne.s32.totalorder %s88, %s90
    %p97 = scmp.eq.s32.totalorder %s17, 1
    %p98 = por %p96, %p97
    %p99 = scmp.ne.s32.totalorder %s90, %s91
    %p100 = scmp.eq.s32.totalorder %s17, 0
    %p101 = por %p99, %p100
    %p102 = scmp.ne.s32.totalorder %s90, %s91
    %p103 = scmp.eq.s32.totalorder %s18, 1
    %p104 = por %p102, %p103
    %p106 = scmp.ne.s32.totalorder %s91, %s105
    %p107 = scmp.eq.s32.totalorder %s18, 0
    %p108 = por %p106, %p107
    %s110 = sadd.s32 %s109, 1
    %p113 = scmp.eq.s32.totalorder %s12, 1
    %p114 = scmp.ne.s32.totalorder %s109, %s111
    %p115 = scmp.eq.s32.totalorder %s12, 0
    %p116 = por %p114, %p115
    %p117 = scmp.ne.s32.totalorder %s109, %s111
    %p118 = scmp.eq.s32.totalorder %s17, 1
    %p119 = por %p117, %p118
    %p120 = scmp.ne.s32.totalorder %s111, %s112
    %p121 = scmp.eq.s32.totalorder %s17, 0
    %p122 = por %p120, %p121
    %p123 = scmp.ne.s32.totalorder %s111, %s112
    %p124 = scmp.eq.s32.totalorder %s18, 1
    %p125 = por %p123, %p124
    %p127 = scmp.ne.s32.totalorder %s112, %s126
    %p128 = scmp.eq.s32.totalorder %s18, 0
    %p129 = por %p127, %p128
    %s131 = sadd.s32 %s130, 1
    %p134 = scmp.eq.s32.totalorder %s12, 1
    %p135 = scmp.ne.s32.totalorder %s130, %s132
    %p136 = scmp.eq.s32.totalorder %s12, 0
    %p137 = por %p135, %p136
    %p138 = scmp.ne.s32.totalorder %s130, %s132
    %p139 = scmp.eq.s32.totalorder %s17, 1
    %p140 = por %p138, %p139
    %p141 = scmp.ne.s32.totalorder %s132, %s133
    %p142 = scmp.eq.s32.totalorder %s17, 0
    %p143 = por %p141, %p142
    %p144 = scmp.ne.s32.totalorder %s132, %s133
    %p145 = scmp.eq.s32.totalorder %s18, 1
    %p146 = por %p144, %p145
    %p148 = scmp.ne.s32.totalorder %s133, %s147
    %p149 = scmp.eq.s32.totalorder %s18, 0
    %p150 = por %p148, %p149
    %s151 = ssub.s32 %s12, %s19
    %p152 = scmp.eq.s32.totalorder %s151, 0
    %s154 = sadd.s32 %s153, 1
    %s155 = scalar_select %p152, %s153, %s154
    %p158 = pneg %p152
    %p159 = scmp.eq.s32.totalorder %s12, 1
    %p160 = por %p158, %p159
    %p161 = scmp.ne.s32.totalorder %s153, %s156
    %p162 = scmp.eq.s32.totalorder %s12, 0
    %p163 = por %p161, %p162
    %p164 = scmp.ne.s32.totalorder %s153, %s156
    %p165 = scmp.eq.s32.totalorder %s17, 1
    %p166 = por %p164, %p165
    %p167 = scmp.ne.s32.totalorder %s156, %s157
    %p168 = scmp.eq.s32.totalorder %s17, 0
    %p169 = por %p167, %p168
    %p170 = scmp.ne.s32.totalorder %s156, %s157
    %p171 = scmp.eq.s32.totalorder %s18, 1
    %p172 = por %p170, %p171
    %p174 = scmp.ne.s32.totalorder %s157, %s173
    %p175 = scmp.eq.s32.totalorder %s18, 0
    %p176 = por %p174, %p175
    %p177 = scmp.le.s32.totalorder 1, %s12
    %p178 = scmp.lt.s32.totalorder %s12, 3
    %p179 = pnand %p177, %p178
    %p180 = pneg %p179
    // Predicated region
    $region9: #{residual_block_nhwc.3} parent=5 // pred_check
      _
    $region10: #{residual_block_nhwc.3} parent=5 // pred_check_branch
      %182 = sbr.rel (%p179) target = $region12
    $region11: #{residual_block_nhwc.3} parent=5 // pred_region
      %s183 = ssub.s32 %s12, 1
      // Predicated region
      $region13: #{residual_block_nhwc.3} parent=11 // pred_check
        %p184 = pneg %p59
      $region14: #{residual_block_nhwc.3} parent=11 // pred_check_branch
        %186 = sbr.rel (%p184) target = $region16
      $region15: #{residual_block_nhwc.3} parent=11 // pred_region
        _
      $region16: #{residual_block_nhwc.3} parent=11 // pred_fallthru
        _
      // Predicated region
      $region17: #{residual_block_nhwc.3} parent=11 // pred_check
        %p187 = pneg %p80
      $region18: #{residual_block_nhwc.3} parent=11 // pred_check_branch
        %189 = sbr.rel (%p187) target = $region20
      $region19: #{residual_block_nhwc.3} parent=11 // pred_region
        _
      $region20: #{residual_block_nhwc.3} parent=11 // pred_fallthru
        _
      // Predicated region
      $region21: #{residual_block_nhwc.3} parent=11 // pred_check
        %p190 = pneg %p101
      $region22: #{residual_block_nhwc.3} parent=11 // pred_check_branch
        %192 = sbr.rel (%p190) target = $region24
      $region23: #{residual_block_nhwc.3} parent=11 // pred_region
        _
      $region24: #{residual_block_nhwc.3} parent=11 // pred_fallthru
        _
      // Predicated region
      $region25: #{residual_block_nhwc.3} parent=11 // pred_check
        %p193 = pneg %p122
      $region26: #{residual_block_nhwc.3} parent=11 // pred_check_branch
        %195 = sbr.rel (%p193) target = $region28
      $region27: #{residual_block_nhwc.3} parent=11 // pred_region
        _
      $region28: #{residual_block_nhwc.3} parent=11 // pred_fallthru
        _
      // Predicated region
      $region29: #{residual_block_nhwc.3} parent=11 // pred_check
        %p196 = pneg %p143
      $region30: #{residual_block_nhwc.3} parent=11 // pred_check_branch
        %198 = sbr.rel (%p196) target = $region32
      $region31: #{residual_block_nhwc.3} parent=11 // pred_region
        _
      $region32: #{residual_block_nhwc.3} parent=11 // pred_fallthru
        _
    $region12: #{residual_block_nhwc.3} parent=5 // pred_fallthru
      _
    %p199 = scmp.lt.s32.totalorder %s12, 2
    // Predicated region
    $region33: #{residual_block_nhwc.3} parent=5 // pred_check
      %p200 = pneg %p199
    $region34: #{residual_block_nhwc.3} parent=5 // pred_check_branch
      %202 = sbr.rel (%p200) target = $region36
    $region35: #{residual_block_nhwc.3} parent=5 // pred_region
      // Predicated region
      $region37: #{residual_block_nhwc.3} parent=35 // pred_check
        %p203 = pneg %p32
      $region38: #{residual_block_nhwc.3} parent=35 // pred_check_branch
        %205 = sbr.rel (%p203) target = $region40
      $region39: #{residual_block_nhwc.3} parent=35 // pred_region
        %p206 = scmp.lt.s32.totalorder %s12, 1
        %s207 = scalar_select %p206, %s12, 1
        %s208 = smul.addr %s207, 2
        %s209 = smul.addr %s208, 8
        %s210 = scalar_lea.vmem %s0, %s209
      $region40: #{residual_block_nhwc.3} parent=35 // pred_fallthru
        _
    $region36: #{residual_block_nhwc.3} parent=5 // pred_fallthru
      _
    %p211 = scmp.le.s32.totalorder 1, %s12
    %p212 = scmp.lt.s32.totalorder %s12, 3
    %p213 = pnand %p211, %p212
    %p214 = pneg %p213
    // Predicated region
    $region41: #{residual_block_nhwc.3} parent=5 // pred_check
      _
    $region42: #{residual_block_nhwc.3} parent=5 // pred_check_branch
      %216 = sbr.rel (%p213) target = $region44
    $region43: #{residual_block_nhwc.3} parent=5 // pred_region
      %s217 = ssub.s32 %s12, 1
      %p218 = scmp.lt.s32.totalorder %s17, 1
      %s219 = scalar_select %p218, %s17, 1
      %s220 = smul.addr %s219, 2
      %s221 = smul.addr %s220, 8
      %s222 = scalar_lea.vmem %s0, %s221
      %p223 = pneg %p38
      %p224 = pneg %p35
      %p225 = pneg %p59
      %p226 = pneg %p56
      %p227 = pneg %p80
      %p228 = pneg %p77
      %p229 = pneg %p101
      %p230 = pneg %p98
      %p231 = pneg %p122
      %p232 = pneg %p119
      %p233 = pneg %p143
      %p234 = pneg %p140
      %p235 = pneg %p169
      %p236 = pneg %p166
      %p237 = scmp.lt.s32.totalorder %s17, 1
      %s238 = scalar_select %p237, %s17, 1
      %s239 = smul.addr %s238, 2
      %s240 = smul.addr %s239, 8
      %s241 = scalar_lea.vmem %s6, %s240
      %p242 = scmp.lt.s32.totalorder %s17, 1
      %s243 = scalar_select %p242, %s17, 1
      %s244 = smul.addr %s243, 2
      %s245 = smul.addr %s244, 8
      %s246 = scalar_lea.vmem %s0, %s245
      %p247 = scmp.lt.s32.totalorder %s17, 1
      %s248 = scalar_select %p247, %s17, 1
      %s249 = smul.addr %s248, 2
      %s250 = smul.addr %s249, 8
      %s251 = scalar_lea.vmem %s6, %s250
      %v253 = vld [vmem:[%s246] sm:$0xff]
      %v254 = vld [vmem:[%s246 + $0x8] sm:$0xff]
      %v255 = vpack.c.bf16 %v254, %v253
      %vm256 = vcmask 1040384
      %vm257 = vsmask.f32 256
      %vm258 = vmand %vm256, %vm257
      %v259 = vld [vmem:[#allocation2] sm:$0x1]
      %v260 = vsel %vm258, 0, %v259
      %261 = vst [vmem:[#allocation2] sm:$0x1] %v260
      %vm262 = vsmask.f32 7938
      %vm263 = vmand %vm256, %vm262
      %v264 = vld [vmem:[#allocation2 + $0x8] sm:$0x1]
      %v265 = vsel %vm263, 0, %v264
      %266 = vst [vmem:[#allocation2 + $0x8] sm:$0x1] %v265
      %v268 = vunpack.c.l.b16 %v255
      %v269 = vunpack.c.h.b16 %v255
      %v270 = vpack.c.b16 %v268, %v268
      %v271 = vpack.c.b16 %v269, %v269
      %vm272 = vsmask.f32 4368
      %vm273 = vmor %vm257, %vm272
      %v275 = vshrl.u32 %v270, 16
      %v277 = vrot.slane %v275, 7
      %v278 = vshll.u32 %v270, 16
      %v280 = vor.u32 %v277, %v278
      %v281 = vrot.slane %v277, 4
      %v283 = vshrl.u32 %v271, 16
      %v285 = vrot.slane %v283, 7
      %v286 = vshll.u32 %v271, 16
      %v288 = vor.u32 %v285, %v286
      %v289 = vsel %vm273, %v281, %v288
      %v290 = vrot.slane %v285, 4
      %vm294 = vcmask 1043456
      %vm295 = vmand %vm294, %vm262
      %v296 = vld [vmem:[#allocation2] sm:$0xf]
      %v297 = vsel %vm295, %v280, %v296
      %298 = vst [vmem:[#allocation2] sm:$0xf] %v297
      %299 = vst [vmem:[#allocation2 + $0x4] sm:$0xf] %v289
      %v300 = vld [vmem:[#allocation2 + $0x8] sm:$0x1]
      %v301 = vsel %vm258, %v290, %v300
      %302 = vst [vmem:[#allocation2 + $0x8] sm:$0x1] %v301
      %v303 = vld [vmem:[#allocation2] sm:$0xf]
      %v304 = vld [vmem:[#allocation2 + $0x4] sm:$0xf]
      %v305 = vld [vmem:[%s1] sm:$0xf]
      %v306 = vld [vmem:[%s1 + $0x4] sm:$0xf]
      %v307 = vld [vmem:[%s1 + $0x8] sm:$0xf]
      %v308 = vld [vmem:[%s1 + $0xc] sm:$0xf]
      %v309 = vld [vmem:[%s1 + $0x10] sm:$0xf]
      %v310 = vld [vmem:[%s1 + $0x14] sm:$0xf]
      %v311 = vld [vmem:[%s1 + $0x18] sm:$0xf]
      %v312 = vld [vmem:[%s1 + $0x1c] sm:$0xf]
      %v313 = vld [vmem:[%s1 + $0x20] sm:$0xf]
      %v314 = vld [vmem:[%s1 + $0x24] sm:$0xf]
      %v315 = vld [vmem:[%s1 + $0x28] sm:$0xf]
      %v316 = vld [vmem:[%s1 + $0x2c] sm:$0xf]
      %v317 = vld [vmem:[%s1 + $0x30] sm:$0xf]
      %v318 = vld [vmem:[%s1 + $0x34] sm:$0xf]
      %v319 = vld [vmem:[%s1 + $0x38] sm:$0xf]
      %v320 = vld [vmem:[%s1 + $0x3c] sm:$0xf]
      %v321 = vld [vmem:[#allocation2 + $0x8] sm:$0x1]
      %s322 = scalar_lea.vmem %s1, 64
      %v323 = vld [vmem:[%s322] sm:$0xf]
      %v324 = vld [vmem:[%s322 + $0x4] sm:$0xf]
      %v325 = vld [vmem:[%s322 + $0x8] sm:$0xf]
      %v326 = vld [vmem:[%s322 + $0xc] sm:$0xf]
      %v327 = vld [vmem:[%s322 + $0x10] sm:$0xf]
      %v328 = vld [vmem:[%s322 + $0x14] sm:$0xf]
      %v329 = vld [vmem:[%s322 + $0x18] sm:$0xf]
      %v330 = vld [vmem:[%s322 + $0x1c] sm:$0xf]
      %v331 = vld [vmem:[%s322 + $0x20] sm:$0xf]
      %v332 = vld [vmem:[%s322 + $0x24] sm:$0xf]
      %v333 = vld [vmem:[%s322 + $0x28] sm:$0xf]
      %v334 = vld [vmem:[%s322 + $0x2c] sm:$0xf]
      %v335 = vld [vmem:[%s322 + $0x30] sm:$0xf]
      %v336 = vld [vmem:[%s322 + $0x34] sm:$0xf]
      %v337 = vld [vmem:[%s322 + $0x38] sm:$0xf]
      %v338 = vld [vmem:[%s322 + $0x3c] sm:$0xf]
      %v342 = vunpack.c.l.b16 %v303
      %v343 = vunpack.c.l.b16 %v304
      %v344 = vunpack.c.l.b16 %v321
      %v345 = vpack.c.b16 %v343, %v342
      %v346 = vpack.c.b16 %v344, %v344
      %vm347 = vsmask.f32 7424
      %v349 = vshrl.u32 %v345, 16
      %v351 = vshll.u32 %v345, 16
      %v353 = vrot.slane %v351, 1
      %v354 = vor.u32 %v349, %v353
      %v356 = vshll.u32 %v346, 16
      %v358 = vrot.slane %v356, 1
      %v359 = vsel %vm347, %v354, %v358
      %v377 = vunpack.c.l.b16 %v323
      %v378 = vunpack.c.l.b16 %v324
      %v379 = vunpack.c.l.b16 %v325
      %v380 = vunpack.c.l.b16 %v326
      %v381 = vunpack.c.l.b16 %v327
      %v382 = vunpack.c.l.b16 %v328
      %v383 = vunpack.c.l.b16 %v329
      %v384 = vunpack.c.l.b16 %v330
      %v385 = vunpack.c.l.b16 %v331
      %v386 = vunpack.c.l.b16 %v332
      %v387 = vunpack.c.l.b16 %v333
      %v388 = vunpack.c.l.b16 %v334
      %v389 = vunpack.c.l.b16 %v335
      %v390 = vunpack.c.l.b16 %v336
      %v391 = vunpack.c.l.b16 %v337
      %v392 = vunpack.c.l.b16 %v338
      %v393 = vpack.c.b16 %v378, %v377
      %v394 = vpack.c.b16 %v380, %v379
      %v395 = vpack.c.b16 %v382, %v381
      %v396 = vpack.c.b16 %v384, %v383
      %v397 = vpack.c.b16 %v386, %v385
      %v398 = vpack.c.b16 %v388, %v387
      %v399 = vpack.c.b16 %v390, %v389
      %v400 = vpack.c.b16 %v392, %v391
      %409 = vmatprep.subr.bf16.mxu0 0
      %410 = vmatpush1.bf16.msra.mxu0 %v400
      %411 = vmatprep.subr.bf16.mxu0 0
      %412 = vmatpush1.bf16.msra.mxu0 %v399
      %413 = vmatprep.subr.bf16.mxu0 0
      %414 = vmatpush1.bf16.msra.mxu0 %v398
      %415 = vmatprep.subr.bf16.mxu0 0
      %416 = vmatpush1.bf16.msra.mxu0 %v397
      %417 = vmatprep.subr.bf16.mxu0 0
      %418 = vmatpush1.bf16.msra.mxu0 %v396
      %419 = vmatprep.subr.bf16.mxu0 0
      %420 = vmatpush1.bf16.msra.mxu0 %v395
      %421 = vmatprep.subr.bf16.mxu0 0
      %422 = vmatpush1.bf16.msra.mxu0 %v394
      %423 = vmatprep.subr.bf16.mxu0 0
      %424 = vmatpush1.bf16.msra.mxu0 %v393
      %425 = vmatprep.subr.bf16.mxu0 0
      %426 = vmatpush2.bf16.msra.mxu0 0
      %427 = vmatprep.subr.bf16.mxu0 0
      %428 = vmatpush2.bf16.msra.mxu0 0
      %429 = vmatprep.subr.bf16.mxu0 0
      %430 = vmatpush2.bf16.msra.mxu0 0
      %431 = vmatprep.subr.bf16.mxu0 0
      %432 = vmatpush2.bf16.msra.mxu0 0
      %433 = vmatprep.subr.bf16.mxu0 0
      %434 = vmatpush2.bf16.msra.mxu0 0
      %435 = vmatprep.subr.bf16.mxu0 0
      %436 = vmatpush2.bf16.msra.mxu0 0
      %437 = vmatprep.subr.bf16.mxu0 0
      %438 = vmatpush2.bf16.msra.mxu0 0
      %439 = vmatprep.subr.bf16.mxu0 0
      %440 = vmatpush2.bf16.msra.mxu0 0
      %441 = vmatprep.mubr.bf16.mxu0 0
      %442 = vmatmul.mubr.bf16.gmra.mxu0 %v359
      %v443 = vpop.f32.mrf.mxu0
      %v444 = vadd.f32 0.0, %v443
      %v445 = vpop.f32.mrf.mxu0
      %v446 = vpop.f32.mrf.mxu0
      %v447 = vadd.f32 0.0, %v446
      %v448 = vpop.f32.mrf.mxu0
      %449 = vdwg.mxu0
      %v467 = vunpack.c.l.b16 %v305
      %v468 = vunpack.c.l.b16 %v306
      %v469 = vunpack.c.l.b16 %v307
      %v470 = vunpack.c.l.b16 %v308
      %v471 = vunpack.c.l.b16 %v309
      %v472 = vunpack.c.l.b16 %v310
      %v473 = vunpack.c.l.b16 %v311
      %v474 = vunpack.c.l.b16 %v312
      %v475 = vunpack.c.l.b16 %v313
      %v476 = vunpack.c.l.b16 %v314
      %v477 = vunpack.c.l.b16 %v315
      %v478 = vunpack.c.l.b16 %v316
      %v479 = vunpack.c.l.b16 %v317
      %v480 = vunpack.c.l.b16 %v318
      %v481 = vunpack.c.l.b16 %v319
      %v482 = vunpack.c.l.b16 %v320
      %v483 = vpack.c.b16 %v468, %v467
      %v484 = vpack.c.b16 %v470, %v469
      %v485 = vpack.c.b16 %v472, %v471
      %v486 = vpack.c.b16 %v474, %v473
      %v487 = vpack.c.b16 %v476, %v475
      %v488 = vpack.c.b16 %v478, %v477
      %v489 = vpack.c.b16 %v480, %v479
      %v490 = vpack.c.b16 %v482, %v481
      %499 = vmatprep.subr.bf16.mxu0 0
      %500 = vmatpush1.bf16.msra.mxu0 %v490
      %501 = vmatprep.subr.bf16.mxu0 0
      %502 = vmatpush1.bf16.msra.mxu0 %v489
      %503 = vmatprep.subr.bf16.mxu0 0
      %504 = vmatpush1.bf16.msra.mxu0 %v488
      %505 = vmatprep.subr.bf16.mxu0 0
      %506 = vmatpush1.bf16.msra.mxu0 %v487
      %507 = vmatprep.subr.bf16.mxu0 0
      %508 = vmatpush1.bf16.msra.mxu0 %v486
      %509 = vmatprep.subr.bf16.mxu0 0
      %510 = vmatpush1.bf16.msra.mxu0 %v485
      %511 = vmatprep.subr.bf16.mxu0 0
      %512 = vmatpush1.bf16.msra.mxu0 %v484
      %513 = vmatprep.subr.bf16.mxu0 0
      %514 = vmatpush1.bf16.msra.mxu0 %v483
      %515 = vmatprep.subr.bf16.mxu0 0
      %516 = vmatpush2.bf16.msra.mxu0 0
      %517 = vmatprep.subr.bf16.mxu0 0
      %518 = vmatpush2.bf16.msra.mxu0 0
      %519 = vmatprep.subr.bf16.mxu0 0
      %520 = vmatpush2.bf16.msra.mxu0 0
      %521 = vmatprep.subr.bf16.mxu0 0
      %522 = vmatpush2.bf16.msra.mxu0 0
      %523 = vmatprep.subr.bf16.mxu0 0
      %524 = vmatpush2.bf16.msra.mxu0 0
      %525 = vmatprep.subr.bf16.mxu0 0
      %526 = vmatpush2.bf16.msra.mxu0 0
      %527 = vmatprep.subr.bf16.mxu0 0
      %528 = vmatpush2.bf16.msra.mxu0 0
      %529 = vmatprep.subr.bf16.mxu0 0
      %530 = vmatpush2.bf16.msra.mxu0 0
      %531 = vmatprep.mubr.bf16.mxu0 0
      %532 = vmatmul.mubr.bf16.gmra.mxu0 %v345
      %v533 = vpop.f32.mrf.mxu0
      %v534 = vadd.f32 %v444, %v533
      %v535 = vpop.f32.mrf.mxu0
      %v536 = vpop.f32.mrf.mxu0
      %v537 = vadd.f32 %v447, %v536
      %v538 = vpop.f32.mrf.mxu0
      %539 = vdwg.mxu0
      %v540 = vld [vmem:[#allocation2] sm:$0xe]
      %s541 = scalar_lea.vmem %s1, 128
      %v542 = vld [vmem:[%s541] sm:$0xf]
      %v543 = vld [vmem:[%s541 + $0x4] sm:$0xf]
      %v544 = vld [vmem:[%s541 + $0x8] sm:$0xf]
      %v545 = vld [vmem:[%s541 + $0xc] sm:$0xf]
      %v546 = vld [vmem:[%s541 + $0x10] sm:$0xf]
      %v547 = vld [vmem:[%s541 + $0x14] sm:$0xf]
      %v548 = vld [vmem:[%s541 + $0x18] sm:$0xf]
      %v549 = vld [vmem:[%s541 + $0x1c] sm:$0xf]
      %v550 = vld [vmem:[%s541 + $0x20] sm:$0xf]
      %v551 = vld [vmem:[%s541 + $0x24] sm:$0xf]
      %v552 = vld [vmem:[%s541 + $0x28] sm:$0xf]
      %v553 = vld [vmem:[%s541 + $0x2c] sm:$0xf]
      %v554 = vld [vmem:[%s541 + $0x30] sm:$0xf]
      %v555 = vld [vmem:[%s541 + $0x34] sm:$0xf]
      %v556 = vld [vmem:[%s541 + $0x38] sm:$0xf]
      %v557 = vld [vmem:[%s541 + $0x3c] sm:$0xf]
      %v559 = vunpack.c.l.b16 %v540
      %v560 = vpack.c.b16 %v343, %v559
      %vm561 = vcmask 1046528
      %v562 = vrot.slane %v560, 1
      %v563 = vrot.slane %v346, 1
      %v564 = vsel %vm561, %v562, %v563
      %v582 = vunpack.c.l.b16 %v542
      %v583 = vunpack.c.l.b16 %v543
      %v584 = vunpack.c.l.b16 %v544
      %v585 = vunpack.c.l.b16 %v545
      %v586 = vunpack.c.l.b16 %v546
      %v587 = vunpack.c.l.b16 %v547
      %v588 = vunpack.c.l.b16 %v548
      %v589 = vunpack.c.l.b16 %v549
      %v590 = vunpack.c.l.b16 %v550
      %v591 = vunpack.c.l.b16 %v551
      %v592 = vunpack.c.l.b16 %v552
      %v593 = vunpack.c.l.b16 %v553
      %v594 = vunpack.c.l.b16 %v554
      %v595 = vunpack.c.l.b16 %v555
      %v596 = vunpack.c.l.b16 %v556
      %v597 = vunpack.c.l.b16 %v557
      %v598 = vpack.c.b16 %v583, %v582
      %v599 = vpack.c.b16 %v585, %v584
      %v600 = vpack.c.b16 %v587, %v586
      %v601 = vpack.c.b16 %v589, %v588
      %v602 = vpack.c.b16 %v591, %v590
      %v603 = vpack.c.b16 %v593, %v592
      %v604 = vpack.c.b16 %v595, %v594
      %v605 = vpack.c.b16 %v597, %v596
      %614 = vmatprep.subr.bf16.mxu0 0
      %615 = vmatpush1.bf16.msra.mxu0 %v605
      %616 = vmatprep.subr.bf16.mxu0 0
      %617 = vmatpush1.bf16.msra.mxu0 %v604
      %618 = vmatprep.subr.bf16.mxu0 0
      %619 = vmatpush1.bf16.msra.mxu0 %v603
      %620 = vmatprep.subr.bf16.mxu0 0
      %621 = vmatpush1.bf16.msra.mxu0 %v602
      %622 = vmatprep.subr.bf16.mxu0 0
      %623 = vmatpush1.bf16.msra.mxu0 %v601
      %624 = vmatprep.subr.bf16.mxu0 0
      %625 = vmatpush1.bf16.msra.mxu0 %v600
      %626 = vmatprep.subr.bf16.mxu0 0
      %627 = vmatpush1.bf16.msra.mxu0 %v599
      %628 = vmatprep.subr.bf16.mxu0 0
      %629 = vmatpush1.bf16.msra.mxu0 %v598
      %630 = vmatprep.subr.bf16.mxu0 0
      %631 = vmatpush2.bf16.msra.mxu0 0
      %632 = vmatprep.subr.bf16.mxu0 0
      %633 = vmatpush2.bf16.msra.mxu0 0
      %634 = vmatprep.subr.bf16.mxu0 0
      %635 = vmatpush2.bf16.msra.mxu0 0
      %636 = vmatprep.subr.bf16.mxu0 0
      %637 = vmatpush2.bf16.msra.mxu0 0
      %638 = vmatprep.subr.bf16.mxu0 0
      %639 = vmatpush2.bf16.msra.mxu0 0
      %640 = vmatprep.subr.bf16.mxu0 0
      %641 = vmatpush2.bf16.msra.mxu0 0
      %642 = vmatprep.subr.bf16.mxu0 0
      %643 = vmatpush2.bf16.msra.mxu0 0
      %644 = vmatprep.subr.bf16.mxu0 0
      %645 = vmatpush2.bf16.msra.mxu0 0
      %646 = vmatprep.mubr.bf16.mxu0 0
      %647 = vmatmul.mubr.bf16.gmra.mxu0 %v564
      %v648 = vpop.f32.mrf.mxu0
      %v649 = vadd.f32 0.0, %v648
      %v650 = vpop.f32.mrf.mxu0
      %v651 = vpop.f32.mrf.mxu0
      %v652 = vadd.f32 0.0, %v651
      %v653 = vpop.f32.mrf.mxu0
      %654 = vdwg.mxu0
      %v655 = vadd.f32 %v534, %v649
      %v656 = vadd.f32 %v537, %v652
      %v657 = vld [vmem:[%s2] sm:$0x1]
      %v659 = vlaneseq
      %v660 = vshrl.u32 %v659, 7
      %v661 = vsub.s32 0, %v660
      %v662 = vrot.slane %v657, %v661
      %v664 = vmul.f32 %v655, %v662
      %v665 = vmul.f32 %v656, %v662
      %v666 = vld [vmem:[%s3] sm:$0x1]
      %v668 = vlaneseq
      %v669 = vshrl.u32 %v668, 7
      %v670 = vsub.s32 0, %v669
      %v671 = vrot.slane %v666, %v670
      %v673 = vadd.f32 %v664, %v671
      %v674 = vadd.f32 %v665, %v671
      %v675 = vmax.f32 %v673, 0.0
      %v676 = vmax.f32 %v674, 0.0
      %v677 = vpack.c.bf16 %v676, %v675
      %v679 = vunpack.c.l.b16 %v677
      %v680 = vunpack.c.h.b16 %v677
      %v681 = vpack.c.b16 %v679, %v679
      %v682 = vpack.c.b16 %v680, %v680
      %v684 = vshrl.u32 %v681, 16
      %v686 = vrot.slane %v684, 7
      %v687 = vshll.u32 %v681, 16
      %v689 = vor.u32 %v686, %v687
      %v690 = vrot.slane %v686, 4
      %v692 = vshrl.u32 %v682, 16
      %v694 = vrot.slane %v692, 7
      %v695 = vshll.u32 %v682, 16
      %v697 = vor.u32 %v694, %v695
      %v698 = vsel %vm273, %v690, %v697
      %v699 = vrot.slane %v694, 4
      %v703 = vsel %vm295, %v689, %v303
      %704 = vst [vmem:[#allocation2] sm:$0xf] %v703
      %705 = vst [vmem:[#allocation2 + $0x4] sm:$0xf] %v698
      %v706 = vld [vmem:[#allocation2 + $0x8] sm:$0x1]
      %v707 = vsel %vm258, %v699, %v706
      %708 = vst [vmem:[#allocation2 + $0x8] sm:$0x1] %v707
      %v709 = vld [vmem:[#allocation2] sm:$0xf]
      %v710 = vld [vmem:[#allocation2 + $0x4] sm:$0xf]
      %v711 = vld [vmem:[%s4] sm:$0xf]
      %v712 = vld [vmem:[%s4 + $0x4] sm:$0xf]
      %v713 = vld [vmem:[%s4 + $0x8] sm:$0xf]
      %v714 = vld [vmem:[%s4 + $0xc] sm:$0xf]
      %v715 = vld [vmem:[%s4 + $0x10] sm:$0xf]
      %v716 = vld [vmem:[%s4 + $0x14] sm:$0xf]
      %v717 = vld [vmem:[%s4 + $0x18] sm:$0xf]
      %v718 = vld [vmem:[%s4 + $0x1c] sm:$0xf]
      %v719 = vld [vmem:[%s4 + $0x20] sm:$0xf]
      %v720 = vld [vmem:[%s4 + $0x24] sm:$0xf]
      %v721 = vld [vmem:[%s4 + $0x28] sm:$0xf]
      %v722 = vld [vmem:[%s4 + $0x2c] sm:$0xf]
      %v723 = vld [vmem:[%s4 + $0x30] sm:$0xf]
      %v724 = vld [vmem:[%s4 + $0x34] sm:$0xf]
      %v725 = vld [vmem:[%s4 + $0x38] sm:$0xf]
      %v726 = vld [vmem:[%s4 + $0x3c] sm:$0xf]
      %v727 = vld [vmem:[#allocation2 + $0x8] sm:$0x1]
      %s728 = scalar_lea.vmem %s4, 64
      %v729 = vld [vmem:[%s728] sm:$0xf]
      %v730 = vld [vmem:[%s728 + $0x4] sm:$0xf]
      %v731 = vld [vmem:[%s728 + $0x8] sm:$0xf]
      %v732 = vld [vmem:[%s728 + $0xc] sm:$0xf]
      %v733 = vld [vmem:[%s728 + $0x10] sm:$0xf]
      %v734 = vld [vmem:[%s728 + $0x14] sm:$0xf]
      %v735 = vld [vmem:[%s728 + $0x18] sm:$0xf]
      %v736 = vld [vmem:[%s728 + $0x1c] sm:$0xf]
      %v737 = vld [vmem:[%s728 + $0x20] sm:$0xf]
      %v738 = vld [vmem:[%s728 + $0x24] sm:$0xf]
      %v739 = vld [vmem:[%s728 + $0x28] sm:$0xf]
      %v740 = vld [vmem:[%s728 + $0x2c] sm:$0xf]
      %v741 = vld [vmem:[%s728 + $0x30] sm:$0xf]
      %v742 = vld [vmem:[%s728 + $0x34] sm:$0xf]
      %v743 = vld [vmem:[%s728 + $0x38] sm:$0xf]
      %v744 = vld [vmem:[%s728 + $0x3c] sm:$0xf]
      %v748 = vunpack.c.l.b16 %v709
      %v749 = vunpack.c.l.b16 %v710
      %v750 = vunpack.c.l.b16 %v727
      %v751 = vpack.c.b16 %v749, %v748
      %v752 = vpack.c.b16 %v750, %v750
      %v754 = vshrl.u32 %v751, 16
      %v756 = vshll.u32 %v751, 16
      %v758 = vrot.slane %v756, 1
      %v759 = vor.u32 %v754, %v758
      %v761 = vshll.u32 %v752, 16
      %v763 = vrot.slane %v761, 1
      %v764 = vsel %vm347, %v759, %v763
      %v782 = vunpack.c.l.b16 %v729
      %v783 = vunpack.c.l.b16 %v730
      %v784 = vunpack.c.l.b16 %v731
      %v785 = vunpack.c.l.b16 %v732
      %v786 = vunpack.c.l.b16 %v733
      %v787 = vunpack.c.l.b16 %v734
      %v788 = vunpack.c.l.b16 %v735
      %v789 = vunpack.c.l.b16 %v736
      %v790 = vunpack.c.l.b16 %v737
      %v791 = vunpack.c.l.b16 %v738
      %v792 = vunpack.c.l.b16 %v739
      %v793 = vunpack.c.l.b16 %v740
      %v794 = vunpack.c.l.b16 %v741
      %v795 = vunpack.c.l.b16 %v742
      %v796 = vunpack.c.l.b16 %v743
      %v797 = vunpack.c.l.b16 %v744
      %v798 = vpack.c.b16 %v783, %v782
      %v799 = vpack.c.b16 %v785, %v784
      %v800 = vpack.c.b16 %v787, %v786
      %v801 = vpack.c.b16 %v789, %v788
      %v802 = vpack.c.b16 %v791, %v790
      %v803 = vpack.c.b16 %v793, %v792
      %v804 = vpack.c.b16 %v795, %v794
      %v805 = vpack.c.b16 %v797, %v796
      %814 = vmatprep.subr.bf16.mxu0 0
      %815 = vmatpush1.bf16.msra.mxu0 %v805
      %816 = vmatprep.subr.bf16.mxu0 0
      %817 = vmatpush1.bf16.msra.mxu0 %v804
      %818 = vmatprep.subr.bf16.mxu0 0
      %819 = vmatpush1.bf16.msra.mxu0 %v803
      %820 = vmatprep.subr.bf16.mxu0 0
      %821 = vmatpush1.bf16.msra.mxu0 %v802
      %822 = vmatprep.subr.bf16.mxu0 0
      %823 = vmatpush1.bf16.msra.mxu0 %v801
      %824 = vmatprep.subr.bf16.mxu0 0
      %825 = vmatpush1.bf16.msra.mxu0 %v800
      %826 = vmatprep.subr.bf16.mxu0 0
      %827 = vmatpush1.bf16.msra.mxu0 %v799
      %828 = vmatprep.subr.bf16.mxu0 0
      %829 = vmatpush1.bf16.msra.mxu0 %v798
      %830 = vmatprep.subr.bf16.mxu0 0
      %831 = vmatpush2.bf16.msra.mxu0 0
      %832 = vmatprep.subr.bf16.mxu0 0
      %833 = vmatpush2.bf16.msra.mxu0 0
      %834 = vmatprep.subr.bf16.mxu0 0
      %835 = vmatpush2.bf16.msra.mxu0 0
      %836 = vmatprep.subr.bf16.mxu0 0
      %837 = vmatpush2.bf16.msra.mxu0 0
      %838 = vmatprep.subr.bf16.mxu0 0
      %839 = vmatpush2.bf16.msra.mxu0 0
      %840 = vmatprep.subr.bf16.mxu0 0
      %841 = vmatpush2.bf16.msra.mxu0 0
      %842 = vmatprep.subr.bf16.mxu0 0
      %843 = vmatpush2.bf16.msra.mxu0 0
      %844 = vmatprep.subr.bf16.mxu0 0
      %845 = vmatpush2.bf16.msra.mxu0 0
      %846 = vmatprep.mubr.bf16.mxu0 0
      %847 = vmatmul.mubr.bf16.gmra.mxu0 %v764
      %v848 = vpop.f32.mrf.mxu0
      %v849 = vadd.f32 0.0, %v848
      %v850 = vpop.f32.mrf.mxu0
      %v851 = vpop.f32.mrf.mxu0
      %v852 = vadd.f32 0.0, %v851
      %v853 = vpop.f32.mrf.mxu0
      %854 = vdwg.mxu0
      %v872 = vunpack.c.l.b16 %v711
      %v873 = vunpack.c.l.b16 %v712
      %v874 = vunpack.c.l.b16 %v713
      %v875 = vunpack.c.l.b16 %v714
      %v876 = vunpack.c.l.b16 %v715
      %v877 = vunpack.c.l.b16 %v716
      %v878 = vunpack.c.l.b16 %v717
      %v879 = vunpack.c.l.b16 %v718
      %v880 = vunpack.c.l.b16 %v719
      %v881 = vunpack.c.l.b16 %v720
      %v882 = vunpack.c.l.b16 %v721
      %v883 = vunpack.c.l.b16 %v722
      %v884 = vunpack.c.l.b16 %v723
      %v885 = vunpack.c.l.b16 %v724
      %v886 = vunpack.c.l.b16 %v725
      %v887 = vunpack.c.l.b16 %v726
      %v888 = vpack.c.b16 %v873, %v872
      %v889 = vpack.c.b16 %v875, %v874
      %v890 = vpack.c.b16 %v877, %v876
      %v891 = vpack.c.b16 %v879, %v878
      %v892 = vpack.c.b16 %v881, %v880
      %v893 = vpack.c.b16 %v883, %v882
      %v894 = vpack.c.b16 %v885, %v884
      %v895 = vpack.c.b16 %v887, %v886
      %904 = vmatprep.subr.bf16.mxu0 0
      %905 = vmatpush1.bf16.msra.mxu0 %v895
      %906 = vmatprep.subr.bf16.mxu0 0
      %907 = vmatpush1.bf16.msra.mxu0 %v894
      %908 = vmatprep.subr.bf16.mxu0 0
      %909 = vmatpush1.bf16.msra.mxu0 %v893
      %910 = vmatprep.subr.bf16.mxu0 0
      %911 = vmatpush1.bf16.msra.mxu0 %v892
      %912 = vmatprep.subr.bf16.mxu0 0
      %913 = vmatpush1.bf16.msra.mxu0 %v891
      %914 = vmatprep.subr.bf16.mxu0 0
      %915 = vmatpush1.bf16.msra.mxu0 %v890
      %916 = vmatprep.subr.bf16.mxu0 0
      %917 = vmatpush1.bf16.msra.mxu0 %v889
      %918 = vmatprep.subr.bf16.mxu0 0
      %919 = vmatpush1.bf16.msra.mxu0 %v888
      %920 = vmatprep.subr.bf16.mxu0 0
      %921 = vmatpush2.bf16.msra.mxu0 0
      %922 = vmatprep.subr.bf16.mxu0 0
      %923 = vmatpush2.bf16.msra.mxu0 0
      %924 = vmatprep.subr.bf16.mxu0 0
      %925 = vmatpush2.bf16.msra.mxu0 0
      %926 = vmatprep.subr.bf16.mxu0 0
      %927 = vmatpush2.bf16.msra.mxu0 0
      %928 = vmatprep.subr.bf16.mxu0 0
      %929 = vmatpush2.bf16.msra.mxu0 0
      %930 = vmatprep.subr.bf16.mxu0 0
      %931 = vmatpush2.bf16.msra.mxu0 0
      %932 = vmatprep.subr.bf16.mxu0 0
      %933 = vmatpush2.bf16.msra.mxu0 0
      %934 = vmatprep.subr.bf16.mxu0 0
      %935 = vmatpush2.bf16.msra.mxu0 0
      %936 = vmatprep.mubr.bf16.mxu0 0
      %937 = vmatmul.mubr.bf16.gmra.mxu0 %v751
      %v938 = vpop.f32.mrf.mxu0
      %v939 = vadd.f32 %v849, %v938
      %v940 = vpop.f32.mrf.mxu0
      %v941 = vpop.f32.mrf.mxu0
      %v942 = vadd.f32 %v852, %v941
      %v943 = vpop.f32.mrf.mxu0
      %944 = vdwg.mxu0
      %v945 = vld [vmem:[#allocation2] sm:$0xe]
      %s946 = scalar_lea.vmem %s4, 128
      %v947 = vld [vmem:[%s946] sm:$0xf]
      %v948 = vld [vmem:[%s946 + $0x4] sm:$0xf]
      %v949 = vld [vmem:[%s946 + $0x8] sm:$0xf]
      %v950 = vld [vmem:[%s946 + $0xc] sm:$0xf]
      %v951 = vld [vmem:[%s946 + $0x10] sm:$0xf]
      %v952 = vld [vmem:[%s946 + $0x14] sm:$0xf]
      %v953 = vld [vmem:[%s946 + $0x18] sm:$0xf]
      %v954 = vld [vmem:[%s946 + $0x1c] sm:$0xf]
      %v955 = vld [vmem:[%s946 + $0x20] sm:$0xf]
      %v956 = vld [vmem:[%s946 + $0x24] sm:$0xf]
      %v957 = vld [vmem:[%s946 + $0x28] sm:$0xf]
      %v958 = vld [vmem:[%s946 + $0x2c] sm:$0xf]
      %v959 = vld [vmem:[%s946 + $0x30] sm:$0xf]
      %v960 = vld [vmem:[%s946 + $0x34] sm:$0xf]
      %v961 = vld [vmem:[%s946 + $0x38] sm:$0xf]
      %v962 = vld [vmem:[%s946 + $0x3c] sm:$0xf]
      %v964 = vunpack.c.l.b16 %v945
      %v965 = vpack.c.b16 %v749, %v964
      %v966 = vrot.slane %v965, 1
      %v967 = vrot.slane %v752, 1
      %v968 = vsel %vm561, %v966, %v967
      %v986 = vunpack.c.l.b16 %v947
      %v987 = vunpack.c.l.b16 %v948
      %v988 = vunpack.c.l.b16 %v949
      %v989 = vunpack.c.l.b16 %v950
      %v990 = vunpack.c.l.b16 %v951
      %v991 = vunpack.c.l.b16 %v952
      %v992 = vunpack.c.l.b16 %v953
      %v993 = vunpack.c.l.b16 %v954
      %v994 = vunpack.c.l.b16 %v955
      %v995 = vunpack.c.l.b16 %v956
      %v996 = vunpack.c.l.b16 %v957
      %v997 = vunpack.c.l.b16 %v958
      %v998 = vunpack.c.l.b16 %v959
      %v999 = vunpack.c.l.b16 %v960
      %v1000 = vunpack.c.l.b16 %v961
      %v1001 = vunpack.c.l.b16 %v962
      %v1002 = vpack.c.b16 %v987, %v986
      %v1003 = vpack.c.b16 %v989, %v988
      %v1004 = vpack.c.b16 %v991, %v990
      %v1005 = vpack.c.b16 %v993, %v992
      %v1006 = vpack.c.b16 %v995, %v994
      %v1007 = vpack.c.b16 %v997, %v996
      %v1008 = vpack.c.b16 %v999, %v998
      %v1009 = vpack.c.b16 %v1001, %v1000
      %1018 = vmatprep.subr.bf16.mxu0 0
      %1019 = vmatpush1.bf16.msra.mxu0 %v1009
      %1020 = vmatprep.subr.bf16.mxu0 0
      %1021 = vmatpush1.bf16.msra.mxu0 %v1008
      %1022 = vmatprep.subr.bf16.mxu0 0
      %1023 = vmatpush1.bf16.msra.mxu0 %v1007
      %1024 = vmatprep.subr.bf16.mxu0 0
      %1025 = vmatpush1.bf16.msra.mxu0 %v1006
      %1026 = vmatprep.subr.bf16.mxu0 0
      %1027 = vmatpush1.bf16.msra.mxu0 %v1005
      %1028 = vmatprep.subr.bf16.mxu0 0
      %1029 = vmatpush1.bf16.msra.mxu0 %v1004
      %1030 = vmatprep.subr.bf16.mxu0 0
      %1031 = vmatpush1.bf16.msra.mxu0 %v1003
      %1032 = vmatprep.subr.bf16.mxu0 0
      %1033 = vmatpush1.bf16.msra.mxu0 %v1002
      %1034 = vmatprep.subr.bf16.mxu0 0
      %1035 = vmatpush2.bf16.msra.mxu0 0
      %1036 = vmatprep.subr.bf16.mxu0 0
      %1037 = vmatpush2.bf16.msra.mxu0 0
      %1038 = vmatprep.subr.bf16.mxu0 0
      %1039 = vmatpush2.bf16.msra.mxu0 0
      %1040 = vmatprep.subr.bf16.mxu0 0
      %1041 = vmatpush2.bf16.msra.mxu0 0
      %1042 = vmatprep.subr.bf16.mxu0 0
      %1043 = vmatpush2.bf16.msra.mxu0 0
      %1044 = vmatprep.subr.bf16.mxu0 0
      %1045 = vmatpush2.bf16.msra.mxu0 0
      %1046 = vmatprep.subr.bf16.mxu0 0
      %1047 = vmatpush2.bf16.msra.mxu0 0
      %1048 = vmatprep.subr.bf16.mxu0 0
      %1049 = vmatpush2.bf16.msra.mxu0 0
      %1050 = vmatprep.mubr.bf16.mxu0 0
      %1051 = vmatmul.mubr.bf16.gmra.mxu0 %v968
      %v1052 = vpop.f32.mrf.mxu0
      %v1053 = vadd.f32 0.0, %v1052
      %v1054 = vpop.f32.mrf.mxu0
      %v1055 = vpop.f32.mrf.mxu0
      %v1056 = vadd.f32 0.0, %v1055
      %v1057 = vpop.f32.mrf.mxu0
      %1058 = vdwg.mxu0
      %v1059 = vadd.f32 %v939, %v1053
      %v1060 = vadd.f32 %v942, %v1056
      %v1061 = vld [vmem:[%s5] sm:$0x1]
      %v1063 = vlaneseq
      %v1064 = vshrl.u32 %v1063, 7
      %v1065 = vsub.s32 0, %v1064
      %v1066 = vrot.slane %v1061, %v1065
      %v1068 = vadd.f32 %v1059, %v1066
      %v1069 = vadd.f32 %v1060, %v1066
      %v1070 = vadd.f32 %v1068, %v253
      %v1071 = vadd.f32 %v1069, %v254
      %v1072 = vmax.f32 %v1070, 0.0
      %v1073 = vmax.f32 %v1071, 0.0
      %1074 = vst [vmem:[%s251] sm:$0xff] %v1072
      %1075 = vst [vmem:[%s251 + $0x8] sm:$0xff] %v1073
      %p1076 = scmp.lt.s32.totalorder %s17, 1
      %s1077 = scalar_select %p1076, %s17, 1
      %s1078 = smul.addr %s1077, 2
      %s1079 = smul.addr %s1078, 8
      %s1080 = scalar_lea.vmem %s6, %s1079
      // Predicated region
      $region45: #{residual_block_nhwc.3} parent=43 // pred_check
        %p1081 = pneg %p166
      $region46: #{residual_block_nhwc.3} parent=43 // pred_check_branch
        %1083 = sbr.rel (%p1081) target = $region48
      $region47: #{residual_block_nhwc.3} parent=43 // pred_region
        _
      $region48: #{residual_block_nhwc.3} parent=43 // pred_fallthru
        _
    $region44: #{residual_block_nhwc.3} parent=5 // pred_fallthru
      _
    %p1084 = scmp.le.s32.totalorder 2, %s12
    // Predicated region
    $region49: #{residual_block_nhwc.3} parent=5 // pred_check
      %p1085 = pneg %p1084
    $region50: #{residual_block_nhwc.3} parent=5 // pred_check_branch
      %1087 = sbr.rel (%p1085) target = $region52
    $region51: #{residual_block_nhwc.3} parent=5 // pred_region
      %s1088 = ssub.s32 %s12, 2
      // Predicated region
      $region53: #{residual_block_nhwc.3} parent=51 // pred_check
        %p1089 = pneg %p172
      $region54: #{residual_block_nhwc.3} parent=51 // pred_check_branch
        %1091 = sbr.rel (%p1089) target = $region56
      $region55: #{residual_block_nhwc.3} parent=51 // pred_region
        %p1092 = scmp.lt.s32.totalorder %s18, 1
        %s1093 = scalar_select %p1092, %s18, 1
        %s1094 = smul.addr %s1093, 2
        %s1095 = smul.addr %s1094, 8
        %s1096 = scalar_lea.vmem %s6, %s1095
      $region56: #{residual_block_nhwc.3} parent=51 // pred_fallthru
        _
    $region52: #{residual_block_nhwc.3} parent=5 // pred_fallthru
      _
  $region6: #{residual_block_nhwc.3} parent=0 // loop_footer
    %s16 = sadd.s32 1, %s12
  $region7: #{residual_block_nhwc.3} parent=0 // loop_footer_branch
    %11 = sbr.rel target = $region3
  $region8: #{residual_block_nhwc.3} parent=0 // loop_exit
    _

</llo_original>
